<compile_context>
chip_gen: v7x
topology: tpu7x:2x2x1
jax: 0.10.0
libtpu: 0.0.40
codegen_flags: <defaults>
</compile_context>

<pallas_src>
import functools
import math

import jax
import jax.numpy as jnp
from jax import lax
from jax.experimental import pallas as pl
from jax.experimental.pallas import tpu as pltpu

_NEG_LARGE = -1e30  # finite mask sentinel (never produces NaN for causal use)


def _pick_tile(dim, target):
    """Largest tile <= target that is either the full dim or a multiple-of-8
    divisor of it (TPU (8,128) block constraint on the second-minor dim)."""
    if dim <= target:
        return dim
    for t in range(min(target, dim), 7, -1):
        if dim % t == 0 and t % 8 == 0:
            return t
    return dim


# ---------------------------------------------------------------------------
# Fused kernel: one (batch, q-tile, kv-tile) grid step.
# ---------------------------------------------------------------------------
def _fused_mha_kernel(q_ref, k_ref, v_ref, wqkv_ref, bqkv_ref, wo_ref, bo_ref,
                      o_ref, q_scr, m_scr, l_scr, acc_scr,
                      *, num_heads, head_dim, causal, compute_dtype, tq, tk):
    f32 = jnp.float32
    cd = compute_dtype
    qi = pl.program_id(1)
    ki = pl.program_id(2)

    # ----- per-(batch, q-tile) init: project Q once, reset online-softmax state
    @pl.when(ki == 0)
    def _init():
        xq = q_ref[0].astype(cd)                                       # (tq, D)
        # 1/sqrt(head_dim) is already folded into Wq / bq (host-side, once).
        q = jnp.dot(xq, wqkv_ref[0], preferred_element_type=f32) + bqkv_ref[0]
        q_scr[...] = q.astype(cd)
        m_scr[...] = jnp.full(m_scr.shape, _NEG_LARGE, f32)
        l_scr[...] = jnp.zeros(l_scr.shape, f32)
        acc_scr[...] = jnp.zeros(acc_scr.shape, f32)

    # ----- one kv tile of online-softmax attention (all heads)
    def _attend():
        xk = k_ref[0].astype(cd)                                       # (tk, D)
        xv = v_ref[0].astype(cd)
        # NOTE: K/V tiles are re-projected once per q tile; for very long
        # sequences a separate K/V-projection pass would trade MXU work for
        # HBM traffic.
        k = (jnp.dot(xk, wqkv_ref[1], preferred_element_type=f32)
             + bqkv_ref[1]).astype(cd)
        v = (jnp.dot(xv, wqkv_ref[2], preferred_element_type=f32)
             + bqkv_ref[2]).astype(cd)

        if causal:  # hoisted out of the head loop — head-independent
            row = qi * tq + lax.broadcasted_iota(jnp.int32, (tq, tk), 0)
            col = ki * tk + lax.broadcasted_iota(jnp.int32, (tq, tk), 1)
            bias = jnp.where(col <= row, 0.0, _NEG_LARGE).astype(f32)

        # Static unroll over heads; every head writes its state straight back
        # to VMEM scratch so live ranges stay bounded to a single head.
        # TODO(synk): for head_dim >= 128 layouts a head-batched dot_general
        # would fill the MXU contraction dim better.
        for h in range(num_heads):
            lo = h * head_dim
            qh = q_scr[:, lo:lo + head_dim]                            # (tq, hd)
            kh = k[:, lo:lo + head_dim]                                # (tk, hd)
            vh = v[:, lo:lo + head_dim]                                # (tk, hd)
            # q @ k^T without an explicit transpose: contract the hd axes.
            s = lax.dot_general(qh, kh, (((1,), (1,)), ((), ())),
                                preferred_element_type=f32)            # (tq, tk)
            if causal:
                s = s + bias
            m_prev = m_scr[:, h:h + 1]                                 # (tq, 1)
            m_new = jnp.maximum(m_prev, jnp.max(s, axis=-1, keepdims=True))
            alpha = jnp.exp(m_prev - m_new)                            # f32
            p = jnp.exp(s - m_new)                                     # f32
            l_scr[:, h:h + 1] = (alpha * l_scr[:, h:h + 1]
                                 + jnp.sum(p, axis=-1, keepdims=True))
            m_scr[:, h:h + 1] = m_new
            acc_scr[:, lo:lo + head_dim] = (
                alpha * acc_scr[:, lo:lo + head_dim]
                + jnp.dot(p.astype(cd), vh, preferred_element_type=f32))

    if causal:
        # Skip kv tiles entirely in the masked future: ~halves MXU + EUP work.
        pl.when(ki * tk <= qi * tq + (tq - 1))(_attend)
    else:
        _attend()

    # ----- per-(batch, q-tile) finalize: normalize + output projection
    @pl.when(ki == pl.num_programs(2) - 1)
    def _finalize():
        inv_l = pl.reciprocal(l_scr[...], approx=True)                 # (tq, H)
        for h in range(num_heads):
            lo = h * head_dim
            acc_scr[:, lo:lo + head_dim] = (
                acc_scr[:, lo:lo + head_dim] * inv_l[:, h:h + 1])
        y = jnp.dot(acc_scr[...].astype(cd), wo_ref[...],
                    preferred_element_type=f32) + bo_ref[...]
        o_ref[0] = y.astype(o_ref.dtype)                   # lane-dense (tq, D)


def attention_layer_forward(query, key, value, kparams, *, num_heads, causal,
                            compute_dtype=jnp.bfloat16,
                            tile_q=256, tile_kv=256):
    B, Lq, D = query.shape
    Lk = key.shape[-2]
    assert D % num_heads == 0
    head_dim = D // num_heads

    tq = _pick_tile(Lq, tile_q)
    tk = _pick_tile(Lk, tile_kv)
    nq, nk = Lq // tq, Lk // tk

    kernel = functools.partial(
        _fused_mha_kernel, num_heads=num_heads, head_dim=head_dim,
        causal=causal, compute_dtype=compute_dtype, tq=tq, tk=tk)

    single = pl.Buffered(1)  # constant-index operands: no double buffering

    return pl.pallas_call(
        kernel,
        out_shape=jax.ShapeDtypeStruct((B, Lq, D), query.dtype),
        grid=(B, nq, nk),
        in_specs=[
            pl.BlockSpec((1, tq, D), lambda b, q, k: (b, q, 0)),
            pl.BlockSpec((1, tk, D), lambda b, q, k: (b, k, 0)),
            pl.BlockSpec((1, tk, D), lambda b, q, k: (b, k, 0)),
            pl.BlockSpec((3, D, D), lambda b, q, k: (0, 0, 0),
                         pipeline_mode=single),              # stacked Wq/Wk/Wv
            pl.BlockSpec((3, 1, D), lambda b, q, k: (0, 0, 0),
                         pipeline_mode=single),              # stacked bq/bk/bv
            pl.BlockSpec((D, D), lambda b, q, k: (0, 0),
                         pipeline_mode=single),              # Wo
            pl.BlockSpec((1, D), lambda b, q, k: (0, 0),
                         pipeline_mode=single),              # bo
        ],
        out_specs=pl.BlockSpec((1, tq, D), lambda b, q, k: (b, q, 0)),
        scratch_shapes=[
            pltpu.VMEM((tq, D), compute_dtype),         # projected q tile
            pltpu.VMEM((tq, num_heads), jnp.float32),   # running max  m
            pltpu.VMEM((tq, num_heads), jnp.float32),   # running sum  l
            pltpu.VMEM((tq, D), jnp.float32),           # output accumulator
        ],
        compiler_params=pltpu.CompilerParams(
            dimension_semantics=("parallel", "parallel", "arbitrary"),
            vmem_limit_bytes=48 * 1024 * 1024),          # v7x-safe budget
    )(query, key, value, kparams["Wqkv"], kparams["bqkv"],
      kparams["Wo"], kparams["bo"])


# ---------------------------------------------------------------------------
# AttentionLayer: parameters + forward
# ---------------------------------------------------------------------------
class AttentionLayerPallas:
    def __init__(self, model_dim, num_heads=8, mask=False, key=None,
                 compute_dtype=jnp.bfloat16, tile_q=256, tile_kv=256):
        assert model_dim % num_heads == 0
        self.model_dim = model_dim
        self.num_heads = num_heads
        self.head_dim = model_dim // num_heads
        self.mask = mask
        self.compute_dtype = compute_dtype   # MXU operand / weight dtype
        self.tile_q = tile_q
        self.tile_kv = tile_kv

        key = jax.random.PRNGKey(0) if key is None else key
        ks = jax.random.split(key, 8)
        bound = 1.0 / math.sqrt(model_dim)   # nn.Linear default init range

        def u(k, shape):
            return jax.random.uniform(k, shape, jnp.float32, -bound, bound)

        D = model_dim
        # Raw torch-equivalent f32 parameters (used by the pure-JAX reference).
        self.params = {
            "Wq": u(ks[0], (D, D)), "bq": u(ks[1], (1, D)),
            "Wk": u(ks[2], (D, D)), "bk": u(ks[3], (1, D)),
            "Wv": u(ks[4], (D, D)), "bv": u(ks[5], (1, D)),
            "Wo": u(ks[6], (D, D)), "bo": u(ks[7], (1, D)),
        }

        # Kernel-side parameters:
        #  * 1/sqrt(head_dim) folded into Wq/bq (one-time host fold),
        #  * Q/K/V weights/biases stacked (one DMA, leading-dim slice in-kernel),
        #  * weights stored in compute_dtype (bf16 default: MXU-native on
        #    v5e/v6e/v7x, halves weight DMA bytes + VMEM); biases stay f32.
        # TODO(synk): optional fp8 weight storage for v7x.
        scale = 1.0 / math.sqrt(self.head_dim)
        p = self.params
        self.kernel_params = {
            "Wqkv": jnp.stack([p["Wq"] * scale, p["Wk"], p["Wv"]]
                              ).astype(compute_dtype),
            "bqkv": jnp.stack([p["bq"] * scale, p["bk"], p["bv"]]
                              ).astype(jnp.float32),
            "Wo": p["Wo"].astype(compute_dtype),
            "bo": p["bo"].astype(jnp.float32),
        }

    def __call__(self, query, key, value):
        # TODO(synk): self-attention fast path (query is key is value) could do
        # one (L,D)x(D,3D) projection matmul instead of three (L,D)x(D,D).
        return attention_layer_forward(
            query, key, value, self.kernel_params,
            num_heads=self.num_heads, causal=self.mask,
            compute_dtype=self.compute_dtype,
            tile_q=self.tile_q, tile_kv=self.tile_kv)


# ---------------------------------------------------------------------------
# Pure-JAX reference (mirrors the torch split/cat head semantics)
# ---------------------------------------------------------------------------
def reference_forward(layer, query, key, value):
    p = layer.params
    H, hd = layer.num_heads, layer.head_dim
    B, Lq, D = query.shape
    Lk = key.shape[-2]
    q = query @ p["Wq"] + p["bq"]
    k = key @ p["Wk"] + p["bk"]
    v = value @ p["Wv"] + p["bv"]
    qh = q.reshape(B, Lq, H, hd).transpose(0, 2, 1, 3)
    kh = k.reshape(B, Lk, H, hd).transpose(0, 2, 1, 3)
    vh = v.reshape(B, Lk, H, hd).transpose(0, 2, 1, 3)
    s = jnp.einsum("bhqd,bhkd->bhqk", qh, kh) / math.sqrt(hd)
    if layer.mask:
        tri = jnp.tril(jnp.ones((Lq, Lk), bool))
        s = jnp.where(tri, s, -jnp.inf)
    a = jax.nn.softmax(s, axis=-1)
    oh = jnp.einsum("bhqk,bhkd->bhqd", a, vh)
    out = oh.transpose(0, 2, 1, 3).reshape(B, Lq, D)
    return out @ p["Wo"] + p["bo"]


if __name__ == "__main__":
    # Small but lane-aligned demo: D=128 keeps the output store lane-dense.
    B, L, D, H = 2, 16, 128, 8   # head_dim = 16
    root = jax.random.PRNGKey(0)
    kq, kk, kv, kparams = jax.random.split(root, 4)
    query = jax.random.normal(kq, (B, L, D), jnp.float32)
    key = jax.random.normal(kk, (B, L, D), jnp.float32)
    value = jax.random.normal(kv, (B, L, D), jnp.float32)

    # 1) default bf16 MXU-operand path, no mask, tiled sequence (2x2 q/kv tiles,
    #    exercises the online-softmax accumulation across kv tiles)
    layer = AttentionLayerPallas(D, num_heads=H, mask=False, key=kparams,
                                 tile_q=8, tile_kv=8)
    out = jax.block_until_ready(layer(query, key, value))
    ref = reference_forward(layer, query, key, value)
    assert out.shape == (B, L, D)
    assert jnp.allclose(out, ref, atol=1e-1, rtol=1e-1), "bf16 unmasked mismatch"

    # 2) default bf16 path, causal mask, tiled sequence (exercises kv-tile skip)
    layer_m = AttentionLayerPallas(D, num_heads=H, mask=True, key=kparams,
                                   tile_q=8, tile_kv=8)
    out_m = jax.block_until_ready(layer_m(query, key, value))
    ref_m = reference_forward(layer_m, query, key, value)
    assert jnp.allclose(out_m, ref_m, atol=1e-1, rtol=1e-1), "bf16 masked mismatch"

    # 3) f32 compute path, causal mask, single kv tile (tolerance covers
    #    default-precision MXU truncation of f32 matmul operands)
    layer_f = AttentionLayerPallas(D, num_heads=H, mask=True, key=kparams,
                                   compute_dtype=jnp.float32)
    out_f = jax.block_until_ready(layer_f(query, key, value))
    assert jnp.allclose(out_f, ref_m, atol=1e-2, rtol=1e-2), "f32 masked mismatch"

    print("KERNEL_OK")
</pallas_src>

<mosaic_0001>
module attributes {stable_mosaic.version = 11 : i64} {
  func.func @_fused_mha_kernel(%arg0: i32, %arg1: i32, %arg2: i32, %arg3: memref<1x8x128xf32, #tpu.memory_space<vmem>>, %arg4: memref<1x8x128xf32, #tpu.memory_space<vmem>>, %arg5: memref<1x8x128xf32, #tpu.memory_space<vmem>>, %arg6: memref<3x128x128xbf16, #tpu.memory_space<vmem>>, %arg7: memref<3x1x128xf32, #tpu.memory_space<vmem>>, %arg8: memref<128x128xbf16, #tpu.memory_space<vmem>>, %arg9: memref<1x128xf32, #tpu.memory_space<vmem>>, %arg10: memref<1x8x128xf32, #tpu.memory_space<vmem>>, %arg11: memref<8x128xbf16, #tpu.memory_space<vmem>>, %arg12: memref<8x8xf32, #tpu.memory_space<vmem>>, %arg13: memref<8x8xf32, #tpu.memory_space<vmem>>, %arg14: memref<8x128xf32, #tpu.memory_space<vmem>>) attributes {dimension_semantics = [#tpu.dimension_semantics<parallel>, #tpu.dimension_semantics<parallel>, #tpu.dimension_semantics<arbitrary>], iteration_bounds = array<i64: 2, 2, 2>, scalar_prefetch = 0 : i64, scratch_operands = 4 : i64, tpu.core_type = #tpu.core_type<tc>, window_params = [{transform_indices = @transform_0, window_bounds = array<i64: 1, 8, 128>}, {transform_indices = @transform_1, window_bounds = array<i64: 1, 8, 128>}, {transform_indices = @transform_2, window_bounds = array<i64: 1, 8, 128>}, {pipeline_mode = #tpu.pipeline_mode<synchronous>, transform_indices = @transform_3, window_bounds = array<i64: 3, 128, 128>}, {pipeline_mode = #tpu.pipeline_mode<synchronous>, transform_indices = @transform_4, window_bounds = array<i64: 3, 1, 128>}, {pipeline_mode = #tpu.pipeline_mode<synchronous>, transform_indices = @transform_5, window_bounds = array<i64: 128, 128>}, {pipeline_mode = #tpu.pipeline_mode<synchronous>, transform_indices = @transform_6, window_bounds = array<i64: 1, 128>}, {transform_indices = @transform_7, window_bounds = array<i64: 1, 8, 128>}]} {
    %c0_i32 = arith.constant 0 : i32
    %0 = arith.cmpi eq, %arg2, %c0_i32 : i32
    %1 = arith.extui %0 : i1 to i32
    %c0_i32_0 = arith.constant 0 : i32
    %2 = arith.cmpi ne, %1, %c0_i32_0 : i32
    scf.if %2 {
      %c0_150 = arith.constant 0 : index
      %c0_151 = arith.constant 0 : index
      %c0_152 = arith.constant 0 : index
      %244 = vector.load %arg3[%c0_150, %c0_151, %c0_152] : memref<1x8x128xf32, #tpu.memory_space<vmem>>, vector<1x8x128xf32>
      %245 = vector.shape_cast %244 : vector<1x8x128xf32> to vector<8x128xf32>
      %246 = arith.truncf %245 : vector<8x128xf32> to vector<8x128xbf16>
      %c0_153 = arith.constant 0 : index
      %c0_154 = arith.constant 0 : index
      %c0_155 = arith.constant 0 : index
      %247 = vector.load %arg6[%c0_153, %c0_154, %c0_155] : memref<3x128x128xbf16, #tpu.memory_space<vmem>>, vector<1x128x128xbf16>
      %248 = vector.shape_cast %247 : vector<1x128x128xbf16> to vector<128x128xbf16>
      %cst_156 = arith.constant dense<0.000000e+00> : vector<8x128xf32>
      %249 = tpu.matmul %246, %248, %cst_156 {dimension_numbers = #tpu.dot_dimension_numbers<[1], [0], [0], [1], [0, 0, 1, 1], [], []>} : vector<8x128xbf16>, vector<128x128xbf16>, vector<8x128xf32> -> vector<8x128xf32>
      %c0_157 = arith.constant 0 : index
      %c0_158 = arith.constant 0 : index
      %c0_159 = arith.constant 0 : index
      %250 = vector.load %arg7[%c0_157, %c0_158, %c0_159] : memref<3x1x128xf32, #tpu.memory_space<vmem>>, vector<1x1x128xf32>
      %251 = vector.shape_cast %250 : vector<1x1x128xf32> to vector<1x128xf32>
      %252 = vector.broadcast %251 : vector<1x128xf32> to vector<8x128xf32>
      %253 = arith.addf %249, %252 : vector<8x128xf32>
      %254 = arith.truncf %253 : vector<8x128xf32> to vector<8x128xbf16>
      %c0_160 = arith.constant 0 : index
      %c0_161 = arith.constant 0 : index
      %255 = vector.load %arg11[%c0_160, %c0_161] : memref<8x128xbf16, #tpu.memory_space<vmem>>, vector<8x128xbf16>
      tpu.vector_store %arg11[%c0_160, %c0_161], %254 {strides = array<i32>} : memref<8x128xbf16, #tpu.memory_space<vmem>>, vector<8x128xbf16>,
      %cst_162 = arith.constant -1.000000e+30 : f32
      %256 = vector.broadcast %cst_162 : f32 to vector<8x8xf32>
      %c0_163 = arith.constant 0 : index
      %c0_164 = arith.constant 0 : index
      %257 = vector.load %arg12[%c0_163, %c0_164] : memref<8x8xf32, #tpu.memory_space<vmem>>, vector<8x8xf32>
      tpu.vector_store %arg12[%c0_163, %c0_164], %256 {strides = array<i32>} : memref<8x8xf32, #tpu.memory_space<vmem>>, vector<8x8xf32>,
      %cst_165 = arith.constant 0.000000e+00 : f32
      %258 = vector.broadcast %cst_165 : f32 to vector<8x8xf32>
      %c0_166 = arith.constant 0 : index
      %c0_167 = arith.constant 0 : index
      %259 = vector.load %arg13[%c0_166, %c0_167] : memref<8x8xf32, #tpu.memory_space<vmem>>, vector<8x8xf32>
      tpu.vector_store %arg13[%c0_166, %c0_167], %258 {strides = array<i32>} : memref<8x8xf32, #tpu.memory_space<vmem>>, vector<8x8xf32>,
      %cst_168 = arith.constant 0.000000e+00 : f32
      %260 = vector.broadcast %cst_168 : f32 to vector<8x128xf32>
      %c0_169 = arith.constant 0 : index
      %c0_170 = arith.constant 0 : index
      %261 = vector.load %arg14[%c0_169, %c0_170] : memref<8x128xf32, #tpu.memory_space<vmem>>, vector<8x128xf32>
      tpu.vector_store %arg14[%c0_169, %c0_170], %260 {strides = array<i32>} : memref<8x128xf32, #tpu.memory_space<vmem>>, vector<8x128xf32>,
    } else {
    }
    %c0 = arith.constant 0 : index
    %c0_1 = arith.constant 0 : index
    %c0_2 = arith.constant 0 : index
    %3 = vector.load %arg4[%c0, %c0_1, %c0_2] : memref<1x8x128xf32, #tpu.memory_space<vmem>>, vector<1x8x128xf32>
    %4 = vector.shape_cast %3 : vector<1x8x128xf32> to vector<8x128xf32>
    %5 = arith.truncf %4 : vector<8x128xf32> to vector<8x128xbf16>
    %c0_3 = arith.constant 0 : index
    %c0_4 = arith.constant 0 : index
    %c0_5 = arith.constant 0 : index
    %6 = vector.load %arg5[%c0_3, %c0_4, %c0_5] : memref<1x8x128xf32, #tpu.memory_space<vmem>>, vector<1x8x128xf32>
    %7 = vector.shape_cast %6 : vector<1x8x128xf32> to vector<8x128xf32>
    %8 = arith.truncf %7 : vector<8x128xf32> to vector<8x128xbf16>
    %c1 = arith.constant 1 : index
    %c0_6 = arith.constant 0 : index
    %c0_7 = arith.constant 0 : index
    %9 = vector.load %arg6[%c1, %c0_6, %c0_7] : memref<3x128x128xbf16, #tpu.memory_space<vmem>>, vector<1x128x128xbf16>
    %10 = vector.shape_cast %9 : vector<1x128x128xbf16> to vector<128x128xbf16>
    %cst = arith.constant dense<0.000000e+00> : vector<8x128xf32>
    %11 = tpu.matmul %5, %10, %cst {dimension_numbers = #tpu.dot_dimension_numbers<[1], [0], [0], [1], [0, 0, 1, 1], [], []>} : vector<8x128xbf16>, vector<128x128xbf16>, vector<8x128xf32> -> vector<8x128xf32>
    %c1_8 = arith.constant 1 : index
    %c0_9 = arith.constant 0 : index
    %c0_10 = arith.constant 0 : index
    %12 = vector.load %arg7[%c1_8, %c0_9, %c0_10] : memref<3x1x128xf32, #tpu.memory_space<vmem>>, vector<1x1x128xf32>
    %13 = vector.shape_cast %12 : vector<1x1x128xf32> to vector<1x128xf32>
    %14 = vector.broadcast %13 : vector<1x128xf32> to vector<8x128xf32>
    %15 = arith.addf %11, %14 : vector<8x128xf32>
    %16 = arith.truncf %15 : vector<8x128xf32> to vector<8x128xbf16>
    %c2 = arith.constant 2 : index
    %c0_11 = arith.constant 0 : index
    %c0_12 = arith.constant 0 : index
    %17 = vector.load %arg6[%c2, %c0_11, %c0_12] : memref<3x128x128xbf16, #tpu.memory_space<vmem>>, vector<1x128x128xbf16>
    %18 = vector.shape_cast %17 : vector<1x128x128xbf16> to vector<128x128xbf16>
    %cst_13 = arith.constant dense<0.000000e+00> : vector<8x128xf32>
    %19 = tpu.matmul %8, %18, %cst_13 {dimension_numbers = #tpu.dot_dimension_numbers<[1], [0], [0], [1], [0, 0, 1, 1], [], []>} : vector<8x128xbf16>, vector<128x128xbf16>, vector<8x128xf32> -> vector<8x128xf32>
    %c2_14 = arith.constant 2 : index
    %c0_15 = arith.constant 0 : index
    %c0_16 = arith.constant 0 : index
    %20 = vector.load %arg7[%c2_14, %c0_15, %c0_16] : memref<3x1x128xf32, #tpu.memory_space<vmem>>, vector<1x1x128xf32>
    %21 = vector.shape_cast %20 : vector<1x1x128xf32> to vector<1x128xf32>
    %22 = vector.broadcast %21 : vector<1x128xf32> to vector<8x128xf32>
    %23 = arith.addf %19, %22 : vector<8x128xf32>
    %24 = arith.truncf %23 : vector<8x128xf32> to vector<8x128xbf16>
    %c0_17 = arith.constant 0 : index
    %c0_18 = arith.constant 0 : index
    %25 = vector.load %arg11[%c0_17, %c0_18] : memref<8x128xbf16, #tpu.memory_space<vmem>>, vector<8x16xbf16>
    %26 = vector.extract_strided_slice %16 {offsets = [0, 0], sizes = [8, 16], strides = [1, 1]} : vector<8x128xbf16> to vector<8x16xbf16>
    %27 = vector.extract_strided_slice %24 {offsets = [0, 0], sizes = [8, 16], strides = [1, 1]} : vector<8x128xbf16> to vector<8x16xbf16>
    %cst_19 = arith.constant dense<0.000000e+00> : vector<8x8xf32>
    %28 = tpu.matmul %25, %26, %cst_19 {dimension_numbers = #tpu.dot_dimension_numbers<[1], [1], [0], [0], [0, 0, 1, 0], [], []>} : vector<8x16xbf16>, vector<8x16xbf16>, vector<8x8xf32> -> vector<8x8xf32>
    %c0_20 = arith.constant 0 : index
    %c0_21 = arith.constant 0 : index
    %29 = vector.load %arg12[%c0_20, %c0_21] : memref<8x8xf32, #tpu.memory_space<vmem>>, vector<8x1xf32>
    %cst_22 = arith.constant dense<0xFF800000> : vector<8xf32>
    %30 = vector.multi_reduction <maximumf>, %28, %cst_22 [1] : vector<8x8xf32> to vector<8xf32>
    %31 = vector.shape_cast %30 : vector<8xf32> to vector<8x1xf32>
    %32 = arith.maximumf %29, %31 : vector<8x1xf32>
    %33 = arith.subf %29, %32 : vector<8x1xf32>
    %34 = math.exp %33 : vector<8x1xf32>
    %35 = vector.broadcast %32 : vector<8x1xf32> to vector<8x8xf32>
    %36 = arith.subf %28, %35 : vector<8x8xf32>
    %37 = math.exp %36 : vector<8x8xf32>
    %c0_23 = arith.constant 0 : index
    %c0_24 = arith.constant 0 : index
    %38 = vector.load %arg13[%c0_23, %c0_24] : memref<8x8xf32, #tpu.memory_space<vmem>>, vector<8x1xf32>
    %39 = arith.mulf %34, %38 : vector<8x1xf32>
    %cst_25 = arith.constant dense<0.000000e+00> : vector<8xf32>
    %40 = vector.multi_reduction <add>, %37, %cst_25 [1] : vector<8x8xf32> to vector<8xf32>
    %41 = vector.shape_cast %40 : vector<8xf32> to vector<8x1xf32>
    %42 = arith.addf %39, %41 : vector<8x1xf32>
    %c0_26 = arith.constant 0 : index
    %c0_27 = arith.constant 0 : index
    %43 = vector.load %arg13[%c0_26, %c0_27] : memref<8x8xf32, #tpu.memory_space<vmem>>, vector<8x1xf32>
    tpu.vector_store %arg13[%c0_26, %c0_27], %42 {strides = array<i32>} : memref<8x8xf32, #tpu.memory_space<vmem>>, vector<8x1xf32>,
    %c0_28 = arith.constant 0 : index
    %c0_29 = arith.constant 0 : index
    %44 = vector.load %arg12[%c0_28, %c0_29] : memref<8x8xf32, #tpu.memory_space<vmem>>, vector<8x1xf32>
    tpu.vector_store %arg12[%c0_28, %c0_29], %32 {strides = array<i32>} : memref<8x8xf32, #tpu.memory_space<vmem>>, vector<8x1xf32>,
    %c0_30 = arith.constant 0 : index
    %c0_31 = arith.constant 0 : index
    %45 = vector.load %arg14[%c0_30, %c0_31] : memref<8x128xf32, #tpu.memory_space<vmem>>, vector<8x16xf32>
    %46 = vector.broadcast %34 : vector<8x1xf32> to vector<8x16xf32>
    %47 = arith.mulf %46, %45 : vector<8x16xf32>
    %48 = arith.truncf %37 : vector<8x8xf32> to vector<8x8xbf16>
    %cst_32 = arith.constant dense<0.000000e+00> : vector<8x16xf32>
    %49 = tpu.matmul %48, %27, %cst_32 {dimension_numbers = #tpu.dot_dimension_numbers<[1], [0], [0], [1], [0, 0, 1, 1], [], []>} : vector<8x8xbf16>, vector<8x16xbf16>, vector<8x16xf32> -> vector<8x16xf32>
    %50 = arith.addf %47, %49 : vector<8x16xf32>
    %c0_33 = arith.constant 0 : index
    %c0_34 = arith.constant 0 : index
    %51 = vector.load %arg14[%c0_33, %c0_34] : memref<8x128xf32, #tpu.memory_space<vmem>>, vector<8x16xf32>
    tpu.vector_store %arg14[%c0_33, %c0_34], %50 {strides = array<i32>} : memref<8x128xf32, #tpu.memory_space<vmem>>, vector<8x16xf32>,
    %c0_35 = arith.constant 0 : index
    %c16 = arith.constant 16 : index
    %52 = vector.load %arg11[%c0_35, %c16] : memref<8x128xbf16, #tpu.memory_space<vmem>>, vector<8x16xbf16>
    %53 = vector.extract_strided_slice %16 {offsets = [0, 16], sizes = [8, 16], strides = [1, 1]} : vector<8x128xbf16> to vector<8x16xbf16>
    %54 = vector.extract_strided_slice %24 {offsets = [0, 16], sizes = [8, 16], strides = [1, 1]} : vector<8x128xbf16> to vector<8x16xbf16>
    %cst_36 = arith.constant dense<0.000000e+00> : vector<8x8xf32>
    %55 = tpu.matmul %52, %53, %cst_36 {dimension_numbers = #tpu.dot_dimension_numbers<[1], [1], [0], [0], [0, 0, 1, 0], [], []>} : vector<8x16xbf16>, vector<8x16xbf16>, vector<8x8xf32> -> vector<8x8xf32>
    %c0_37 = arith.constant 0 : index
    %c1_38 = arith.constant 1 : index
    %56 = vector.load %arg12[%c0_37, %c1_38] : memref<8x8xf32, #tpu.memory_space<vmem>>, vector<8x1xf32>
    %cst_39 = arith.constant dense<0xFF800000> : vector<8xf32>
    %57 = vector.multi_reduction <maximumf>, %55, %cst_39 [1] : vector<8x8xf32> to vector<8xf32>
    %58 = vector.shape_cast %57 : vector<8xf32> to vector<8x1xf32>
    %59 = arith.maximumf %56, %58 : vector<8x1xf32>
    %60 = arith.subf %56, %59 : vector<8x1xf32>
    %61 = math.exp %60 : vector<8x1xf32>
    %62 = vector.broadcast %59 : vector<8x1xf32> to vector<8x8xf32>
    %63 = arith.subf %55, %62 : vector<8x8xf32>
    %64 = math.exp %63 : vector<8x8xf32>
    %c0_40 = arith.constant 0 : index
    %c1_41 = arith.constant 1 : index
    %65 = vector.load %arg13[%c0_40, %c1_41] : memref<8x8xf32, #tpu.memory_space<vmem>>, vector<8x1xf32>
    %66 = arith.mulf %61, %65 : vector<8x1xf32>
    %cst_42 = arith.constant dense<0.000000e+00> : vector<8xf32>
    %67 = vector.multi_reduction <add>, %64, %cst_42 [1] : vector<8x8xf32> to vector<8xf32>
    %68 = vector.shape_cast %67 : vector<8xf32> to vector<8x1xf32>
    %69 = arith.addf %66, %68 : vector<8x1xf32>
    %c0_43 = arith.constant 0 : index
    %c1_44 = arith.constant 1 : index
    %70 = vector.load %arg13[%c0_43, %c1_44] : memref<8x8xf32, #tpu.memory_space<vmem>>, vector<8x1xf32>
    tpu.vector_store %arg13[%c0_43, %c1_44], %69 {strides = array<i32>} : memref<8x8xf32, #tpu.memory_space<vmem>>, vector<8x1xf32>,
    %c0_45 = arith.constant 0 : index
    %c1_46 = arith.constant 1 : index
    %71 = vector.load %arg12[%c0_45, %c1_46] : memref<8x8xf32, #tpu.memory_space<vmem>>, vector<8x1xf32>
    tpu.vector_store %arg12[%c0_45, %c1_46], %59 {strides = array<i32>} : memref<8x8xf32, #tpu.memory_space<vmem>>, vector<8x1xf32>,
    %c0_47 = arith.constant 0 : index
    %c16_48 = arith.constant 16 : index
    %72 = vector.load %arg14[%c0_47, %c16_48] : memref<8x128xf32, #tpu.memory_space<vmem>>, vector<8x16xf32>
    %73 = vector.broadcast %61 : vector<8x1xf32> to vector<8x16xf32>
    %74 = arith.mulf %73, %72 : vector<8x16xf32>
    %75 = arith.truncf %64 : vector<8x8xf32> to vector<8x8xbf16>
    %cst_49 = arith.constant dense<0.000000e+00> : vector<8x16xf32>
    %76 = tpu.matmul %75, %54, %cst_49 {dimension_numbers = #tpu.dot_dimension_numbers<[1], [0], [0], [1], [0, 0, 1, 1], [], []>} : vector<8x8xbf16>, vector<8x16xbf16>, vector<8x16xf32> -> vector<8x16xf32>
    %77 = arith.addf %74, %76 : vector<8x16xf32>
    %c0_50 = arith.constant 0 : index
    %c16_51 = arith.constant 16 : index
    %78 = vector.load %arg14[%c0_50, %c16_51] : memref<8x128xf32, #tpu.memory_space<vmem>>, vector<8x16xf32>
    tpu.vector_store %arg14[%c0_50, %c16_51], %77 {strides = array<i32>} : memref<8x128xf32, #tpu.memory_space<vmem>>, vector<8x16xf32>,
    %c0_52 = arith.constant 0 : index
    %c32 = arith.constant 32 : index
    %79 = vector.load %arg11[%c0_52, %c32] : memref<8x128xbf16, #tpu.memory_space<vmem>>, vector<8x16xbf16>
    %80 = vector.extract_strided_slice %16 {offsets = [0, 32], sizes = [8, 16], strides = [1, 1]} : vector<8x128xbf16> to vector<8x16xbf16>
    %81 = vector.extract_strided_slice %24 {offsets = [0, 32], sizes = [8, 16], strides = [1, 1]} : vector<8x128xbf16> to vector<8x16xbf16>
    %cst_53 = arith.constant dense<0.000000e+00> : vector<8x8xf32>
    %82 = tpu.matmul %79, %80, %cst_53 {dimension_numbers = #tpu.dot_dimension_numbers<[1], [1], [0], [0], [0, 0, 1, 0], [], []>} : vector<8x16xbf16>, vector<8x16xbf16>, vector<8x8xf32> -> vector<8x8xf32>
    %c0_54 = arith.constant 0 : index
    %c2_55 = arith.constant 2 : index
    %83 = vector.load %arg12[%c0_54, %c2_55] : memref<8x8xf32, #tpu.memory_space<vmem>>, vector<8x1xf32>
    %cst_56 = arith.constant dense<0xFF800000> : vector<8xf32>
    %84 = vector.multi_reduction <maximumf>, %82, %cst_56 [1] : vector<8x8xf32> to vector<8xf32>
    %85 = vector.shape_cast %84 : vector<8xf32> to vector<8x1xf32>
    %86 = arith.maximumf %83, %85 : vector<8x1xf32>
    %87 = arith.subf %83, %86 : vector<8x1xf32>
    %88 = math.exp %87 : vector<8x1xf32>
    %89 = vector.broadcast %86 : vector<8x1xf32> to vector<8x8xf32>
    %90 = arith.subf %82, %89 : vector<8x8xf32>
    %91 = math.exp %90 : vector<8x8xf32>
    %c0_57 = arith.constant 0 : index
    %c2_58 = arith.constant 2 : index
    %92 = vector.load %arg13[%c0_57, %c2_58] : memref<8x8xf32, #tpu.memory_space<vmem>>, vector<8x1xf32>
    %93 = arith.mulf %88, %92 : vector<8x1xf32>
    %cst_59 = arith.constant dense<0.000000e+00> : vector<8xf32>
    %94 = vector.multi_reduction <add>, %91, %cst_59 [1] : vector<8x8xf32> to vector<8xf32>
    %95 = vector.shape_cast %94 : vector<8xf32> to vector<8x1xf32>
    %96 = arith.addf %93, %95 : vector<8x1xf32>
    %c0_60 = arith.constant 0 : index
    %c2_61 = arith.constant 2 : index
    %97 = vector.load %arg13[%c0_60, %c2_61] : memref<8x8xf32, #tpu.memory_space<vmem>>, vector<8x1xf32>
    tpu.vector_store %arg13[%c0_60, %c2_61], %96 {strides = array<i32>} : memref<8x8xf32, #tpu.memory_space<vmem>>, vector<8x1xf32>,
    %c0_62 = arith.constant 0 : index
    %c2_63 = arith.constant 2 : index
    %98 = vector.load %arg12[%c0_62, %c2_63] : memref<8x8xf32, #tpu.memory_space<vmem>>, vector<8x1xf32>
    tpu.vector_store %arg12[%c0_62, %c2_63], %86 {strides = array<i32>} : memref<8x8xf32, #tpu.memory_space<vmem>>, vector<8x1xf32>,
    %c0_64 = arith.constant 0 : index
    %c32_65 = arith.constant 32 : index
    %99 = vector.load %arg14[%c0_64, %c32_65] : memref<8x128xf32, #tpu.memory_space<vmem>>, vector<8x16xf32>
    %100 = vector.broadcast %88 : vector<8x1xf32> to vector<8x16xf32>
    %101 = arith.mulf %100, %99 : vector<8x16xf32>
    %102 = arith.truncf %91 : vector<8x8xf32> to vector<8x8xbf16>
    %cst_66 = arith.constant dense<0.000000e+00> : vector<8x16xf32>
    %103 = tpu.matmul %102, %81, %cst_66 {dimension_numbers = #tpu.dot_dimension_numbers<[1], [0], [0], [1], [0, 0, 1, 1], [], []>} : vector<8x8xbf16>, vector<8x16xbf16>, vector<8x16xf32> -> vector<8x16xf32>
    %104 = arith.addf %101, %103 : vector<8x16xf32>
    %c0_67 = arith.constant 0 : index
    %c32_68 = arith.constant 32 : index
    %105 = vector.load %arg14[%c0_67, %c32_68] : memref<8x128xf32, #tpu.memory_space<vmem>>, vector<8x16xf32>
    tpu.vector_store %arg14[%c0_67, %c32_68], %104 {strides = array<i32>} : memref<8x128xf32, #tpu.memory_space<vmem>>, vector<8x16xf32>,
    %c0_69 = arith.constant 0 : index
    %c48 = arith.constant 48 : index
    %106 = vector.load %arg11[%c0_69, %c48] : memref<8x128xbf16, #tpu.memory_space<vmem>>, vector<8x16xbf16>
    %107 = vector.extract_strided_slice %16 {offsets = [0, 48], sizes = [8, 16], strides = [1, 1]} : vector<8x128xbf16> to vector<8x16xbf16>
    %108 = vector.extract_strided_slice %24 {offsets = [0, 48], sizes = [8, 16], strides = [1, 1]} : vector<8x128xbf16> to vector<8x16xbf16>
    %cst_70 = arith.constant dense<0.000000e+00> : vector<8x8xf32>
    %109 = tpu.matmul %106, %107, %cst_70 {dimension_numbers = #tpu.dot_dimension_numbers<[1], [1], [0], [0], [0, 0, 1, 0], [], []>} : vector<8x16xbf16>, vector<8x16xbf16>, vector<8x8xf32> -> vector<8x8xf32>
    %c0_71 = arith.constant 0 : index
    %c3 = arith.constant 3 : index
    %110 = vector.load %arg12[%c0_71, %c3] : memref<8x8xf32, #tpu.memory_space<vmem>>, vector<8x1xf32>
    %cst_72 = arith.constant dense<0xFF800000> : vector<8xf32>
    %111 = vector.multi_reduction <maximumf>, %109, %cst_72 [1] : vector<8x8xf32> to vector<8xf32>
    %112 = vector.shape_cast %111 : vector<8xf32> to vector<8x1xf32>
    %113 = arith.maximumf %110, %112 : vector<8x1xf32>
    %114 = arith.subf %110, %113 : vector<8x1xf32>
    %115 = math.exp %114 : vector<8x1xf32>
    %116 = vector.broadcast %113 : vector<8x1xf32> to vector<8x8xf32>
    %117 = arith.subf %109, %116 : vector<8x8xf32>
    %118 = math.exp %117 : vector<8x8xf32>
    %c0_73 = arith.constant 0 : index
    %c3_74 = arith.constant 3 : index
    %119 = vector.load %arg13[%c0_73, %c3_74] : memref<8x8xf32, #tpu.memory_space<vmem>>, vector<8x1xf32>
    %120 = arith.mulf %115, %119 : vector<8x1xf32>
    %cst_75 = arith.constant dense<0.000000e+00> : vector<8xf32>
    %121 = vector.multi_reduction <add>, %118, %cst_75 [1] : vector<8x8xf32> to vector<8xf32>
    %122 = vector.shape_cast %121 : vector<8xf32> to vector<8x1xf32>
    %123 = arith.addf %120, %122 : vector<8x1xf32>
    %c0_76 = arith.constant 0 : index
    %c3_77 = arith.constant 3 : index
    %124 = vector.load %arg13[%c0_76, %c3_77] : memref<8x8xf32, #tpu.memory_space<vmem>>, vector<8x1xf32>
    tpu.vector_store %arg13[%c0_76, %c3_77], %123 {strides = array<i32>} : memref<8x8xf32, #tpu.memory_space<vmem>>, vector<8x1xf32>,
    %c0_78 = arith.constant 0 : index
    %c3_79 = arith.constant 3 : index
    %125 = vector.load %arg12[%c0_78, %c3_79] : memref<8x8xf32, #tpu.memory_space<vmem>>, vector<8x1xf32>
    tpu.vector_store %arg12[%c0_78, %c3_79], %113 {strides = array<i32>} : memref<8x8xf32, #tpu.memory_space<vmem>>, vector<8x1xf32>,
    %c0_80 = arith.constant 0 : index
    %c48_81 = arith.constant 48 : index
    %126 = vector.load %arg14[%c0_80, %c48_81] : memref<8x128xf32, #tpu.memory_space<vmem>>, vector<8x16xf32>
    %127 = vector.broadcast %115 : vector<8x1xf32> to vector<8x16xf32>
    %128 = arith.mulf %127, %126 : vector<8x16xf32>
    %129 = arith.truncf %118 : vector<8x8xf32> to vector<8x8xbf16>
    %cst_82 = arith.constant dense<0.000000e+00> : vector<8x16xf32>
    %130 = tpu.matmul %129, %108, %cst_82 {dimension_numbers = #tpu.dot_dimension_numbers<[1], [0], [0], [1], [0, 0, 1, 1], [], []>} : vector<8x8xbf16>, vector<8x16xbf16>, vector<8x16xf32> -> vector<8x16xf32>
    %131 = arith.addf %128, %130 : vector<8x16xf32>
    %c0_83 = arith.constant 0 : index
    %c48_84 = arith.constant 48 : index
    %132 = vector.load %arg14[%c0_83, %c48_84] : memref<8x128xf32, #tpu.memory_space<vmem>>, vector<8x16xf32>
    tpu.vector_store %arg14[%c0_83, %c48_84], %131 {strides = array<i32>} : memref<8x128xf32, #tpu.memory_space<vmem>>, vector<8x16xf32>,
    %c0_85 = arith.constant 0 : index
    %c64 = arith.constant 64 : index
    %133 = vector.load %arg11[%c0_85, %c64] : memref<8x128xbf16, #tpu.memory_space<vmem>>, vector<8x16xbf16>
    %134 = vector.extract_strided_slice %16 {offsets = [0, 64], sizes = [8, 16], strides = [1, 1]} : vector<8x128xbf16> to vector<8x16xbf16>
    %135 = vector.extract_strided_slice %24 {offsets = [0, 64], sizes = [8, 16], strides = [1, 1]} : vector<8x128xbf16> to vector<8x16xbf16>
    %cst_86 = arith.constant dense<0.000000e+00> : vector<8x8xf32>
    %136 = tpu.matmul %133, %134, %cst_86 {dimension_numbers = #tpu.dot_dimension_numbers<[1], [1], [0], [0], [0, 0, 1, 0], [], []>} : vector<8x16xbf16>, vector<8x16xbf16>, vector<8x8xf32> -> vector<8x8xf32>
    %c0_87 = arith.constant 0 : index
    %c4 = arith.constant 4 : index
    %137 = vector.load %arg12[%c0_87, %c4] : memref<8x8xf32, #tpu.memory_space<vmem>>, vector<8x1xf32>
    %cst_88 = arith.constant dense<0xFF800000> : vector<8xf32>
    %138 = vector.multi_reduction <maximumf>, %136, %cst_88 [1] : vector<8x8xf32> to vector<8xf32>
    %139 = vector.shape_cast %138 : vector<8xf32> to vector<8x1xf32>
    %140 = arith.maximumf %137, %139 : vector<8x1xf32>
    %141 = arith.subf %137, %140 : vector<8x1xf32>
    %142 = math.exp %141 : vector<8x1xf32>
    %143 = vector.broadcast %140 : vector<8x1xf32> to vector<8x8xf32>
    %144 = arith.subf %136, %143 : vector<8x8xf32>
    %145 = math.exp %144 : vector<8x8xf32>
    %c0_89 = arith.constant 0 : index
    %c4_90 = arith.constant 4 : index
    %146 = vector.load %arg13[%c0_89, %c4_90] : memref<8x8xf32, #tpu.memory_space<vmem>>, vector<8x1xf32>
    %147 = arith.mulf %142, %146 : vector<8x1xf32>
    %cst_91 = arith.constant dense<0.000000e+00> : vector<8xf32>
    %148 = vector.multi_reduction <add>, %145, %cst_91 [1] : vector<8x8xf32> to vector<8xf32>
    %149 = vector.shape_cast %148 : vector<8xf32> to vector<8x1xf32>
    %150 = arith.addf %147, %149 : vector<8x1xf32>
    %c0_92 = arith.constant 0 : index
    %c4_93 = arith.constant 4 : index
    %151 = vector.load %arg13[%c0_92, %c4_93] : memref<8x8xf32, #tpu.memory_space<vmem>>, vector<8x1xf32>
    tpu.vector_store %arg13[%c0_92, %c4_93], %150 {strides = array<i32>} : memref<8x8xf32, #tpu.memory_space<vmem>>, vector<8x1xf32>,
    %c0_94 = arith.constant 0 : index
    %c4_95 = arith.constant 4 : index
    %152 = vector.load %arg12[%c0_94, %c4_95] : memref<8x8xf32, #tpu.memory_space<vmem>>, vector<8x1xf32>
    tpu.vector_store %arg12[%c0_94, %c4_95], %140 {strides = array<i32>} : memref<8x8xf32, #tpu.memory_space<vmem>>, vector<8x1xf32>,
    %c0_96 = arith.constant 0 : index
    %c64_97 = arith.constant 64 : index
    %153 = vector.load %arg14[%c0_96, %c64_97] : memref<8x128xf32, #tpu.memory_space<vmem>>, vector<8x16xf32>
    %154 = vector.broadcast %142 : vector<8x1xf32> to vector<8x16xf32>
    %155 = arith.mulf %154, %153 : vector<8x16xf32>
    %156 = arith.truncf %145 : vector<8x8xf32> to vector<8x8xbf16>
    %cst_98 = arith.constant dense<0.000000e+00> : vector<8x16xf32>
    %157 = tpu.matmul %156, %135, %cst_98 {dimension_numbers = #tpu.dot_dimension_numbers<[1], [0], [0], [1], [0, 0, 1, 1], [], []>} : vector<8x8xbf16>, vector<8x16xbf16>, vector<8x16xf32> -> vector<8x16xf32>
    %158 = arith.addf %155, %157 : vector<8x16xf32>
    %c0_99 = arith.constant 0 : index
    %c64_100 = arith.constant 64 : index
    %159 = vector.load %arg14[%c0_99, %c64_100] : memref<8x128xf32, #tpu.memory_space<vmem>>, vector<8x16xf32>
    tpu.vector_store %arg14[%c0_99, %c64_100], %158 {strides = array<i32>} : memref<8x128xf32, #tpu.memory_space<vmem>>, vector<8x16xf32>,
    %c0_101 = arith.constant 0 : index
    %c80 = arith.constant 80 : index
    %160 = vector.load %arg11[%c0_101, %c80] : memref<8x128xbf16, #tpu.memory_space<vmem>>, vector<8x16xbf16>
    %161 = vector.extract_strided_slice %16 {offsets = [0, 80], sizes = [8, 16], strides = [1, 1]} : vector<8x128xbf16> to vector<8x16xbf16>
    %162 = vector.extract_strided_slice %24 {offsets = [0, 80], sizes = [8, 16], strides = [1, 1]} : vector<8x128xbf16> to vector<8x16xbf16>
    %cst_102 = arith.constant dense<0.000000e+00> : vector<8x8xf32>
    %163 = tpu.matmul %160, %161, %cst_102 {dimension_numbers = #tpu.dot_dimension_numbers<[1], [1], [0], [0], [0, 0, 1, 0], [], []>} : vector<8x16xbf16>, vector<8x16xbf16>, vector<8x8xf32> -> vector<8x8xf32>
    %c0_103 = arith.constant 0 : index
    %c5 = arith.constant 5 : index
    %164 = vector.load %arg12[%c0_103, %c5] : memref<8x8xf32, #tpu.memory_space<vmem>>, vector<8x1xf32>
    %cst_104 = arith.constant dense<0xFF800000> : vector<8xf32>
    %165 = vector.multi_reduction <maximumf>, %163, %cst_104 [1] : vector<8x8xf32> to vector<8xf32>
    %166 = vector.shape_cast %165 : vector<8xf32> to vector<8x1xf32>
    %167 = arith.maximumf %164, %166 : vector<8x1xf32>
    %168 = arith.subf %164, %167 : vector<8x1xf32>
    %169 = math.exp %168 : vector<8x1xf32>
    %170 = vector.broadcast %167 : vector<8x1xf32> to vector<8x8xf32>
    %171 = arith.subf %163, %170 : vector<8x8xf32>
    %172 = math.exp %171 : vector<8x8xf32>
    %c0_105 = arith.constant 0 : index
    %c5_106 = arith.constant 5 : index
    %173 = vector.load %arg13[%c0_105, %c5_106] : memref<8x8xf32, #tpu.memory_space<vmem>>, vector<8x1xf32>
    %174 = arith.mulf %169, %173 : vector<8x1xf32>
    %cst_107 = arith.constant dense<0.000000e+00> : vector<8xf32>
    %175 = vector.multi_reduction <add>, %172, %cst_107 [1] : vector<8x8xf32> to vector<8xf32>
    %176 = vector.shape_cast %175 : vector<8xf32> to vector<8x1xf32>
    %177 = arith.addf %174, %176 : vector<8x1xf32>
    %c0_108 = arith.constant 0 : index
    %c5_109 = arith.constant 5 : index
    %178 = vector.load %arg13[%c0_108, %c5_109] : memref<8x8xf32, #tpu.memory_space<vmem>>, vector<8x1xf32>
    tpu.vector_store %arg13[%c0_108, %c5_109], %177 {strides = array<i32>} : memref<8x8xf32, #tpu.memory_space<vmem>>, vector<8x1xf32>,
    %c0_110 = arith.constant 0 : index
    %c5_111 = arith.constant 5 : index
    %179 = vector.load %arg12[%c0_110, %c5_111] : memref<8x8xf32, #tpu.memory_space<vmem>>, vector<8x1xf32>
    tpu.vector_store %arg12[%c0_110, %c5_111], %167 {strides = array<i32>} : memref<8x8xf32, #tpu.memory_space<vmem>>, vector<8x1xf32>,
    %c0_112 = arith.constant 0 : index
    %c80_113 = arith.constant 80 : index
    %180 = vector.load %arg14[%c0_112, %c80_113] : memref<8x128xf32, #tpu.memory_space<vmem>>, vector<8x16xf32>
    %181 = vector.broadcast %169 : vector<8x1xf32> to vector<8x16xf32>
    %182 = arith.mulf %181, %180 : vector<8x16xf32>
    %183 = arith.truncf %172 : vector<8x8xf32> to vector<8x8xbf16>
    %cst_114 = arith.constant dense<0.000000e+00> : vector<8x16xf32>
    %184 = tpu.matmul %183, %162, %cst_114 {dimension_numbers = #tpu.dot_dimension_numbers<[1], [0], [0], [1], [0, 0, 1, 1], [], []>} : vector<8x8xbf16>, vector<8x16xbf16>, vector<8x16xf32> -> vector<8x16xf32>
    %185 = arith.addf %182, %184 : vector<8x16xf32>
    %c0_115 = arith.constant 0 : index
    %c80_116 = arith.constant 80 : index
    %186 = vector.load %arg14[%c0_115, %c80_116] : memref<8x128xf32, #tpu.memory_space<vmem>>, vector<8x16xf32>
    tpu.vector_store %arg14[%c0_115, %c80_116], %185 {strides = array<i32>} : memref<8x128xf32, #tpu.memory_space<vmem>>, vector<8x16xf32>,
    %c0_117 = arith.constant 0 : index
    %c96 = arith.constant 96 : index
    %187 = vector.load %arg11[%c0_117, %c96] : memref<8x128xbf16, #tpu.memory_space<vmem>>, vector<8x16xbf16>
    %188 = vector.extract_strided_slice %16 {offsets = [0, 96], sizes = [8, 16], strides = [1, 1]} : vector<8x128xbf16> to vector<8x16xbf16>
    %189 = vector.extract_strided_slice %24 {offsets = [0, 96], sizes = [8, 16], strides = [1, 1]} : vector<8x128xbf16> to vector<8x16xbf16>
    %cst_118 = arith.constant dense<0.000000e+00> : vector<8x8xf32>
    %190 = tpu.matmul %187, %188, %cst_118 {dimension_numbers = #tpu.dot_dimension_numbers<[1], [1], [0], [0], [0, 0, 1, 0], [], []>} : vector<8x16xbf16>, vector<8x16xbf16>, vector<8x8xf32> -> vector<8x8xf32>
    %c0_119 = arith.constant 0 : index
    %c6 = arith.constant 6 : index
    %191 = vector.load %arg12[%c0_119, %c6] : memref<8x8xf32, #tpu.memory_space<vmem>>, vector<8x1xf32>
    %cst_120 = arith.constant dense<0xFF800000> : vector<8xf32>
    %192 = vector.multi_reduction <maximumf>, %190, %cst_120 [1] : vector<8x8xf32> to vector<8xf32>
    %193 = vector.shape_cast %192 : vector<8xf32> to vector<8x1xf32>
    %194 = arith.maximumf %191, %193 : vector<8x1xf32>
    %195 = arith.subf %191, %194 : vector<8x1xf32>
    %196 = math.exp %195 : vector<8x1xf32>
    %197 = vector.broadcast %194 : vector<8x1xf32> to vector<8x8xf32>
    %198 = arith.subf %190, %197 : vector<8x8xf32>
    %199 = math.exp %198 : vector<8x8xf32>
    %c0_121 = arith.constant 0 : index
    %c6_122 = arith.constant 6 : index
    %200 = vector.load %arg13[%c0_121, %c6_122] : memref<8x8xf32, #tpu.memory_space<vmem>>, vector<8x1xf32>
    %201 = arith.mulf %196, %200 : vector<8x1xf32>
    %cst_123 = arith.constant dense<0.000000e+00> : vector<8xf32>
    %202 = vector.multi_reduction <add>, %199, %cst_123 [1] : vector<8x8xf32> to vector<8xf32>
    %203 = vector.shape_cast %202 : vector<8xf32> to vector<8x1xf32>
    %204 = arith.addf %201, %203 : vector<8x1xf32>
    %c0_124 = arith.constant 0 : index
    %c6_125 = arith.constant 6 : index
    %205 = vector.load %arg13[%c0_124, %c6_125] : memref<8x8xf32, #tpu.memory_space<vmem>>, vector<8x1xf32>
    tpu.vector_store %arg13[%c0_124, %c6_125], %204 {strides = array<i32>} : memref<8x8xf32, #tpu.memory_space<vmem>>, vector<8x1xf32>,
    %c0_126 = arith.constant 0 : index
    %c6_127 = arith.constant 6 : index
    %206 = vector.load %arg12[%c0_126, %c6_127] : memref<8x8xf32, #tpu.memory_space<vmem>>, vector<8x1xf32>
    tpu.vector_store %arg12[%c0_126, %c6_127], %194 {strides = array<i32>} : memref<8x8xf32, #tpu.memory_space<vmem>>, vector<8x1xf32>,
    %c0_128 = arith.constant 0 : index
    %c96_129 = arith.constant 96 : index
    %207 = vector.load %arg14[%c0_128, %c96_129] : memref<8x128xf32, #tpu.memory_space<vmem>>, vector<8x16xf32>
    %208 = vector.broadcast %196 : vector<8x1xf32> to vector<8x16xf32>
    %209 = arith.mulf %208, %207 : vector<8x16xf32>
    %210 = arith.truncf %199 : vector<8x8xf32> to vector<8x8xbf16>
    %cst_130 = arith.constant dense<0.000000e+00> : vector<8x16xf32>
    %211 = tpu.matmul %210, %189, %cst_130 {dimension_numbers = #tpu.dot_dimension_numbers<[1], [0], [0], [1], [0, 0, 1, 1], [], []>} : vector<8x8xbf16>, vector<8x16xbf16>, vector<8x16xf32> -> vector<8x16xf32>
    %212 = arith.addf %209, %211 : vector<8x16xf32>
    %c0_131 = arith.constant 0 : index
    %c96_132 = arith.constant 96 : index
    %213 = vector.load %arg14[%c0_131, %c96_132] : memref<8x128xf32, #tpu.memory_space<vmem>>, vector<8x16xf32>
    tpu.vector_store %arg14[%c0_131, %c96_132], %212 {strides = array<i32>} : memref<8x128xf32, #tpu.memory_space<vmem>>, vector<8x16xf32>,
    %c0_133 = arith.constant 0 : index
    %c112 = arith.constant 112 : index
    %214 = vector.load %arg11[%c0_133, %c112] : memref<8x128xbf16, #tpu.memory_space<vmem>>, vector<8x16xbf16>
    %215 = vector.extract_strided_slice %16 {offsets = [0, 112], sizes = [8, 16], strides = [1, 1]} : vector<8x128xbf16> to vector<8x16xbf16>
    %216 = vector.extract_strided_slice %24 {offsets = [0, 112], sizes = [8, 16], strides = [1, 1]} : vector<8x128xbf16> to vector<8x16xbf16>
    %cst_134 = arith.constant dense<0.000000e+00> : vector<8x8xf32>
    %217 = tpu.matmul %214, %215, %cst_134 {dimension_numbers = #tpu.dot_dimension_numbers<[1], [1], [0], [0], [0, 0, 1, 0], [], []>} : vector<8x16xbf16>, vector<8x16xbf16>, vector<8x8xf32> -> vector<8x8xf32>
    %c0_135 = arith.constant 0 : index
    %c7 = arith.constant 7 : index
    %218 = vector.load %arg12[%c0_135, %c7] : memref<8x8xf32, #tpu.memory_space<vmem>>, vector<8x1xf32>
    %cst_136 = arith.constant dense<0xFF800000> : vector<8xf32>
    %219 = vector.multi_reduction <maximumf>, %217, %cst_136 [1] : vector<8x8xf32> to vector<8xf32>
    %220 = vector.shape_cast %219 : vector<8xf32> to vector<8x1xf32>
    %221 = arith.maximumf %218, %220 : vector<8x1xf32>
    %222 = arith.subf %218, %221 : vector<8x1xf32>
    %223 = math.exp %222 : vector<8x1xf32>
    %224 = vector.broadcast %221 : vector<8x1xf32> to vector<8x8xf32>
    %225 = arith.subf %217, %224 : vector<8x8xf32>
    %226 = math.exp %225 : vector<8x8xf32>
    %c0_137 = arith.constant 0 : index
    %c7_138 = arith.constant 7 : index
    %227 = vector.load %arg13[%c0_137, %c7_138] : memref<8x8xf32, #tpu.memory_space<vmem>>, vector<8x1xf32>
    %228 = arith.mulf %223, %227 : vector<8x1xf32>
    %cst_139 = arith.constant dense<0.000000e+00> : vector<8xf32>
    %229 = vector.multi_reduction <add>, %226, %cst_139 [1] : vector<8x8xf32> to vector<8xf32>
    %230 = vector.shape_cast %229 : vector<8xf32> to vector<8x1xf32>
    %231 = arith.addf %228, %230 : vector<8x1xf32>
    %c0_140 = arith.constant 0 : index
    %c7_141 = arith.constant 7 : index
    %232 = vector.load %arg13[%c0_140, %c7_141] : memref<8x8xf32, #tpu.memory_space<vmem>>, vector<8x1xf32>
    tpu.vector_store %arg13[%c0_140, %c7_141], %231 {strides = array<i32>} : memref<8x8xf32, #tpu.memory_space<vmem>>, vector<8x1xf32>,
    %c0_142 = arith.constant 0 : index
    %c7_143 = arith.constant 7 : index
    %233 = vector.load %arg12[%c0_142, %c7_143] : memref<8x8xf32, #tpu.memory_space<vmem>>, vector<8x1xf32>
    tpu.vector_store %arg12[%c0_142, %c7_143], %221 {strides = array<i32>} : memref<8x8xf32, #tpu.memory_space<vmem>>, vector<8x1xf32>,
    %c0_144 = arith.constant 0 : index
    %c112_145 = arith.constant 112 : index
    %234 = vector.load %arg14[%c0_144, %c112_145] : memref<8x128xf32, #tpu.memory_space<vmem>>, vector<8x16xf32>
    %235 = vector.broadcast %223 : vector<8x1xf32> to vector<8x16xf32>
    %236 = arith.mulf %235, %234 : vector<8x16xf32>
    %237 = arith.truncf %226 : vector<8x8xf32> to vector<8x8xbf16>
    %cst_146 = arith.constant dense<0.000000e+00> : vector<8x16xf32>
    %238 = tpu.matmul %237, %216, %cst_146 {dimension_numbers = #tpu.dot_dimension_numbers<[1], [0], [0], [1], [0, 0, 1, 1], [], []>} : vector<8x8xbf16>, vector<8x16xbf16>, vector<8x16xf32> -> vector<8x16xf32>
    %239 = arith.addf %236, %238 : vector<8x16xf32>
    %c0_147 = arith.constant 0 : index
    %c112_148 = arith.constant 112 : index
    %240 = vector.load %arg14[%c0_147, %c112_148] : memref<8x128xf32, #tpu.memory_space<vmem>>, vector<8x16xf32>
    tpu.vector_store %arg14[%c0_147, %c112_148], %239 {strides = array<i32>} : memref<8x128xf32, #tpu.memory_space<vmem>>, vector<8x16xf32>,
    %c1_i32 = arith.constant 1 : i32
    %241 = arith.cmpi eq, %arg2, %c1_i32 : i32
    %242 = arith.extui %241 : i1 to i32
    %c0_i32_149 = arith.constant 0 : i32
    %243 = arith.cmpi ne, %242, %c0_i32_149 : i32
    scf.if %243 {
      %c0_150 = arith.constant 0 : index
      %c0_151 = arith.constant 0 : index
      %244 = vector.load %arg13[%c0_150, %c0_151] : memref<8x8xf32, #tpu.memory_space<vmem>>, vector<8x8xf32>
      %245 = tpu.reciprocal %244 {approx = true} : vector<8x8xf32> -> vector<8x8xf32>
      %c0_152 = arith.constant 0 : index
      %c0_153 = arith.constant 0 : index
      %246 = vector.load %arg14[%c0_152, %c0_153] : memref<8x128xf32, #tpu.memory_space<vmem>>, vector<8x16xf32>
      %247 = vector.extract_strided_slice %245 {offsets = [0, 0], sizes = [8, 1], strides = [1, 1]} : vector<8x8xf32> to vector<8x1xf32>
      %248 = vector.broadcast %247 : vector<8x1xf32> to vector<8x16xf32>
      %249 = arith.mulf %246, %248 : vector<8x16xf32>
      %c0_154 = arith.constant 0 : index
      %c0_155 = arith.constant 0 : index
      %250 = vector.load %arg14[%c0_154, %c0_155] : memref<8x128xf32, #tpu.memory_space<vmem>>, vector<8x16xf32>
      tpu.vector_store %arg14[%c0_154, %c0_155], %249 {strides = array<i32>} : memref<8x128xf32, #tpu.memory_space<vmem>>, vector<8x16xf32>,
      %c0_156 = arith.constant 0 : index
      %c16_157 = arith.constant 16 : index
      %251 = vector.load %arg14[%c0_156, %c16_157] : memref<8x128xf32, #tpu.memory_space<vmem>>, vector<8x16xf32>
      %252 = vector.extract_strided_slice %245 {offsets = [0, 1], sizes = [8, 1], strides = [1, 1]} : vector<8x8xf32> to vector<8x1xf32>
      %253 = vector.broadcast %252 : vector<8x1xf32> to vector<8x16xf32>
      %254 = arith.mulf %251, %253 : vector<8x16xf32>
      %c0_158 = arith.constant 0 : index
      %c16_159 = arith.constant 16 : index
      %255 = vector.load %arg14[%c0_158, %c16_159] : memref<8x128xf32, #tpu.memory_space<vmem>>, vector<8x16xf32>
      tpu.vector_store %arg14[%c0_158, %c16_159], %254 {strides = array<i32>} : memref<8x128xf32, #tpu.memory_space<vmem>>, vector<8x16xf32>,
      %c0_160 = arith.constant 0 : index
      %c32_161 = arith.constant 32 : index
      %256 = vector.load %arg14[%c0_160, %c32_161] : memref<8x128xf32, #tpu.memory_space<vmem>>, vector<8x16xf32>
      %257 = vector.extract_strided_slice %245 {offsets = [0, 2], sizes = [8, 1], strides = [1, 1]} : vector<8x8xf32> to vector<8x1xf32>
      %258 = vector.broadcast %257 : vector<8x1xf32> to vector<8x16xf32>
      %259 = arith.mulf %256, %258 : vector<8x16xf32>
      %c0_162 = arith.constant 0 : index
      %c32_163 = arith.constant 32 : index
      %260 = vector.load %arg14[%c0_162, %c32_163] : memref<8x128xf32, #tpu.memory_space<vmem>>, vector<8x16xf32>
      tpu.vector_store %arg14[%c0_162, %c32_163], %259 {strides = array<i32>} : memref<8x128xf32, #tpu.memory_space<vmem>>, vector<8x16xf32>,
      %c0_164 = arith.constant 0 : index
      %c48_165 = arith.constant 48 : index
      %261 = vector.load %arg14[%c0_164, %c48_165] : memref<8x128xf32, #tpu.memory_space<vmem>>, vector<8x16xf32>
      %262 = vector.extract_strided_slice %245 {offsets = [0, 3], sizes = [8, 1], strides = [1, 1]} : vector<8x8xf32> to vector<8x1xf32>
      %263 = vector.broadcast %262 : vector<8x1xf32> to vector<8x16xf32>
      %264 = arith.mulf %261, %263 : vector<8x16xf32>
      %c0_166 = arith.constant 0 : index
      %c48_167 = arith.constant 48 : index
      %265 = vector.load %arg14[%c0_166, %c48_167] : memref<8x128xf32, #tpu.memory_space<vmem>>, vector<8x16xf32>
      tpu.vector_store %arg14[%c0_166, %c48_167], %264 {strides = array<i32>} : memref<8x128xf32, #tpu.memory_space<vmem>>, vector<8x16xf32>,
      %c0_168 = arith.constant 0 : index
      %c64_169 = arith.constant 64 : index
      %266 = vector.load %arg14[%c0_168, %c64_169] : memref<8x128xf32, #tpu.memory_space<vmem>>, vector<8x16xf32>
      %267 = vector.extract_strided_slice %245 {offsets = [0, 4], sizes = [8, 1], strides = [1, 1]} : vector<8x8xf32> to vector<8x1xf32>
      %268 = vector.broadcast %267 : vector<8x1xf32> to vector<8x16xf32>
      %269 = arith.mulf %266, %268 : vector<8x16xf32>
      %c0_170 = arith.constant 0 : index
      %c64_171 = arith.constant 64 : index
      %270 = vector.load %arg14[%c0_170, %c64_171] : memref<8x128xf32, #tpu.memory_space<vmem>>, vector<8x16xf32>
      tpu.vector_store %arg14[%c0_170, %c64_171], %269 {strides = array<i32>} : memref<8x128xf32, #tpu.memory_space<vmem>>, vector<8x16xf32>,
      %c0_172 = arith.constant 0 : index
      %c80_173 = arith.constant 80 : index
      %271 = vector.load %arg14[%c0_172, %c80_173] : memref<8x128xf32, #tpu.memory_space<vmem>>, vector<8x16xf32>
      %272 = vector.extract_strided_slice %245 {offsets = [0, 5], sizes = [8, 1], strides = [1, 1]} : vector<8x8xf32> to vector<8x1xf32>
      %273 = vector.broadcast %272 : vector<8x1xf32> to vector<8x16xf32>
      %274 = arith.mulf %271, %273 : vector<8x16xf32>
      %c0_174 = arith.constant 0 : index
      %c80_175 = arith.constant 80 : index
      %275 = vector.load %arg14[%c0_174, %c80_175] : memref<8x128xf32, #tpu.memory_space<vmem>>, vector<8x16xf32>
      tpu.vector_store %arg14[%c0_174, %c80_175], %274 {strides = array<i32>} : memref<8x128xf32, #tpu.memory_space<vmem>>, vector<8x16xf32>,
      %c0_176 = arith.constant 0 : index
      %c96_177 = arith.constant 96 : index
      %276 = vector.load %arg14[%c0_176, %c96_177] : memref<8x128xf32, #tpu.memory_space<vmem>>, vector<8x16xf32>
      %277 = vector.extract_strided_slice %245 {offsets = [0, 6], sizes = [8, 1], strides = [1, 1]} : vector<8x8xf32> to vector<8x1xf32>
      %278 = vector.broadcast %277 : vector<8x1xf32> to vector<8x16xf32>
      %279 = arith.mulf %276, %278 : vector<8x16xf32>
      %c0_178 = arith.constant 0 : index
      %c96_179 = arith.constant 96 : index
      %280 = vector.load %arg14[%c0_178, %c96_179] : memref<8x128xf32, #tpu.memory_space<vmem>>, vector<8x16xf32>
      tpu.vector_store %arg14[%c0_178, %c96_179], %279 {strides = array<i32>} : memref<8x128xf32, #tpu.memory_space<vmem>>, vector<8x16xf32>,
      %c0_180 = arith.constant 0 : index
      %c112_181 = arith.constant 112 : index
      %281 = vector.load %arg14[%c0_180, %c112_181] : memref<8x128xf32, #tpu.memory_space<vmem>>, vector<8x16xf32>
      %282 = vector.extract_strided_slice %245 {offsets = [0, 7], sizes = [8, 1], strides = [1, 1]} : vector<8x8xf32> to vector<8x1xf32>
      %283 = vector.broadcast %282 : vector<8x1xf32> to vector<8x16xf32>
      %284 = arith.mulf %281, %283 : vector<8x16xf32>
      %c0_182 = arith.constant 0 : index
      %c112_183 = arith.constant 112 : index
      %285 = vector.load %arg14[%c0_182, %c112_183] : memref<8x128xf32, #tpu.memory_space<vmem>>, vector<8x16xf32>
      tpu.vector_store %arg14[%c0_182, %c112_183], %284 {strides = array<i32>} : memref<8x128xf32, #tpu.memory_space<vmem>>, vector<8x16xf32>,
      %c0_184 = arith.constant 0 : index
      %c0_185 = arith.constant 0 : index
      %286 = vector.load %arg14[%c0_184, %c0_185] : memref<8x128xf32, #tpu.memory_space<vmem>>, vector<8x128xf32>
      %287 = arith.truncf %286 : vector<8x128xf32> to vector<8x128xbf16>
      %c0_186 = arith.constant 0 : index
      %c0_187 = arith.constant 0 : index
      %288 = vector.load %arg8[%c0_186, %c0_187] : memref<128x128xbf16, #tpu.memory_space<vmem>>, vector<128x128xbf16>
      %cst_188 = arith.constant dense<0.000000e+00> : vector<8x128xf32>
      %289 = tpu.matmul %287, %288, %cst_188 {dimension_numbers = #tpu.dot_dimension_numbers<[1], [0], [0], [1], [0, 0, 1, 1], [], []>} : vector<8x128xbf16>, vector<128x128xbf16>, vector<8x128xf32> -> vector<8x128xf32>
      %c0_189 = arith.constant 0 : index
      %c0_190 = arith.constant 0 : index
      %290 = vector.load %arg9[%c0_189, %c0_190] : memref<1x128xf32, #tpu.memory_space<vmem>>, vector<1x128xf32>
      %291 = vector.broadcast %290 : vector<1x128xf32> to vector<8x128xf32>
      %292 = arith.addf %289, %291 : vector<8x128xf32>
      %c0_191 = arith.constant 0 : index
      %c0_192 = arith.constant 0 : index
      %c0_193 = arith.constant 0 : index
      %293 = vector.load %arg10[%c0_191, %c0_192, %c0_193] : memref<1x8x128xf32, #tpu.memory_space<vmem>>, vector<1x8x128xf32>
      %294 = vector.shape_cast %293 : vector<1x8x128xf32> to vector<8x128xf32>
      %295 = vector.shape_cast %292 : vector<8x128xf32> to vector<1x8x128xf32>
      tpu.vector_store %arg10[%c0_191, %c0_192, %c0_193], %295 {strides = array<i32>} : memref<1x8x128xf32, #tpu.memory_space<vmem>>, vector<1x8x128xf32>,
    } else {
    }
    return
  }
  func.func @transform_0(%arg0: i32, %arg1: i32, %arg2: i32) -> (i32, i32, i32) {
    %c0_i32 = arith.constant 0 : i32
    %c0_i32_0 = arith.constant 0 : i32
    return %arg0, %arg1, %c0_i32 : i32, i32, i32
  }
  func.func @transform_1(%arg0: i32, %arg1: i32, %arg2: i32) -> (i32, i32, i32) {
    %c0_i32 = arith.constant 0 : i32
    %c0_i32_0 = arith.constant 0 : i32
    return %arg0, %arg2, %c0_i32 : i32, i32, i32
  }
  func.func @transform_2(%arg0: i32, %arg1: i32, %arg2: i32) -> (i32, i32, i32) {
    %c0_i32 = arith.constant 0 : i32
    %c0_i32_0 = arith.constant 0 : i32
    return %arg0, %arg2, %c0_i32 : i32, i32, i32
  }
  func.func @transform_3(%arg0: i32, %arg1: i32, %arg2: i32) -> (i32, i32, i32) {
    %c0_i32 = arith.constant 0 : i32
    %c0_i32_0 = arith.constant 0 : i32
    %c0_i32_1 = arith.constant 0 : i32
    %c0_i32_2 = arith.constant 0 : i32
    return %c0_i32, %c0_i32_0, %c0_i32_1 : i32, i32, i32
  }
  func.func @transform_4(%arg0: i32, %arg1: i32, %arg2: i32) -> (i32, i32, i32) {
    %c0_i32 = arith.constant 0 : i32
    %c0_i32_0 = arith.constant 0 : i32
    %c0_i32_1 = arith.constant 0 : i32
    %c0_i32_2 = arith.constant 0 : i32
    return %c0_i32, %c0_i32_0, %c0_i32_1 : i32, i32, i32
  }
  func.func @transform_5(%arg0: i32, %arg1: i32, %arg2: i32) -> (i32, i32) {
    %c0_i32 = arith.constant 0 : i32
    %c0_i32_0 = arith.constant 0 : i32
    %c0_i32_1 = arith.constant 0 : i32
    return %c0_i32, %c0_i32_0 : i32, i32
  }
  func.func @transform_6(%arg0: i32, %arg1: i32, %arg2: i32) -> (i32, i32) {
    %c0_i32 = arith.constant 0 : i32
    %c0_i32_0 = arith.constant 0 : i32
    %c0_i32_1 = arith.constant 0 : i32
    return %c0_i32, %c0_i32_0 : i32, i32
  }
  func.func @transform_7(%arg0: i32, %arg1: i32, %arg2: i32) -> (i32, i32, i32) {
    %c0_i32 = arith.constant 0 : i32
    %c0_i32_0 = arith.constant 0 : i32
    return %arg0, %arg1, %c0_i32 : i32, i32, i32
  }
}

</mosaic_0001>

<llo_original>
// kernel: tpu_custom_call.1
$region0: #{tpu_custom_call.1}
  #allocation0 [shape = 'u32[]', space=smem, size = 0x4, offset = 0x4, fixed_abs, tag = 'smem constant byte address 0x4 - core index']
  #allocation1 [shape = 'u32[144,128]{1,0:T(1,128)}', space=vmem, size = 0x12000, scoped, tag = 'internal scratch']
  #allocation2 [shape = 'bf16[8,128]{1,0:T(8,128)(2,1)}', space=vmem, size = 0x800, scoped, tag = 'scratch operand']
  #allocation3 [shape = 'f32[8,8]{1,0:T(8,128)}', space=vmem, size = 0x1000, scoped, tag = 'scratch operand']
  #allocation4 [shape = 'f32[8,8]{1,0:T(8,128)}', space=vmem, size = 0x1000, scoped, tag = 'scratch operand']
  #allocation5 [shape = 'f32[8,128]{1,0:T(8,128)}', space=vmem, size = 0x1000, scoped, tag = 'scratch operand']
  %s0 = inlined_call_operand.hbm [shape: f32[2,16,128], index: 0, kind: input, shape index: {}]
  %s1 = inlined_call_operand.hbm [shape: f32[2,16,128], index: 1, kind: input, shape index: {}]
  %s2 = inlined_call_operand.hbm [shape: f32[2,16,128], index: 2, kind: input, shape index: {}]
  %s3 = inlined_call_operand.hbm [shape: bf16[3,128,128], index: 3, kind: input, shape index: {}]
  %s4 = inlined_call_operand.vmem [shape: f32[3,1,128], index: 4, kind: input, shape index: {}]
  %s5 = inlined_call_operand.hbm [shape: bf16[128,128], index: 5, kind: input, shape index: {}]
  %s6 = inlined_call_operand.vmem [shape: f32[1,128], index: 6, kind: input, shape index: {}]
  %s7 = inlined_call_operand.hbm [shape: f32[2,16,128], index: 7, kind: output, shape index: {}]
  %s8 = sld [smem:[#allocation0]]
  $region89: #{tpu_custom_call.1} parent=0
    _
  %s10 = ssub.s32 1, %s8
  %s11 = scalar_select 0, %s10, %s8
  $region1: #{tpu_custom_call.1} parent=0
    #allocation6 [shape = 'u8[8192]{0}', space=vmem, size = 0x2000, scoped, tag = 'input window, operand 0']
    #allocation7 [shape = 's32[2]{0}', space=sflag, size = 0x8, scoped, tag = 'scoped memory for tpu_custom_call.1']
    #allocation8 [shape = 's32[2]{0}', space=sflag, size = 0x8, scoped, tag = 'scoped memory for tpu_custom_call.1']
    #allocation9 [shape = 'u8[8192]{0}', space=vmem, size = 0x2000, scoped, tag = 'input window, operand 1']
    #allocation10 [shape = 's32[2]{0}', space=sflag, size = 0x8, scoped, tag = 'scoped memory for tpu_custom_call.1']
    #allocation11 [shape = 'u8[8192]{0}', space=vmem, size = 0x2000, scoped, tag = 'input window, operand 2']
    #allocation12 [shape = 'u8[98304]{0}', space=vmem, size = 0x18000, scoped, tag = 'input window, operand 3, single buffered']
    #allocation13 [shape = 's32[1]{0}', space=sflag, size = 0x4, scoped, tag = 'scoped memory for tpu_custom_call.1']
    #allocation14 [shape = 'u8[32768]{0}', space=vmem, size = 0x8000, scoped, tag = 'input window, operand 5, single buffered']
    #allocation15 [shape = 'u8[8192]{0}', space=vmem, size = 0x2000, scoped, tag = 'output window, operand 0']
    %12 = vsyncpa [#allocation7], 0
    %s13 = scalar_lea.sflag [#allocation7], 1
    %14 = vsyncpa %s13, 0
    %15 = vsyncpa [#allocation10], 0
    %s16 = scalar_lea.sflag [#allocation10], 1
    %17 = vsyncpa %s16, 0
    %18 = vsyncpa [#allocation13], 0
    %19 = vsyncpa [#allocation8], 0
    %s20 = scalar_lea.sflag [#allocation8], 1
    %21 = vsyncpa %s20, 0
    loop: start=0, step=1, limit=10
    $region2: #{tpu_custom_call.1} parent=1 // loop_pre_header
      _
    $region3: #{tpu_custom_call.1} parent=1 // loop_header
      %s23 = sphi 0, %s27
      %p24 = scmp.ge.s32.totalorder %s23, 10
      %s30 = sphi 0, %s49
      %s31 = sphi 0, %s45
      %s32 = sphi 0, %s41
      %s33 = sphi 0, %s30
      %s34 = sphi 0, %s31
      %s35 = sphi 0, %s32
      %s36 = sphi 0, %s33
      %s37 = sphi 0, %s34
      %s38 = sphi 0, %s35
      %s54 = sphi 0, %s56
      %s57 = sphi 0, %s54
      %s58 = sphi 0, %s57
      %s74 = sphi 0, %s58
      %s82 = sphi 0, %s84
      %s85 = sphi 0, %s82
      %s86 = sphi 0, %s85
      %s102 = sphi 0, %s86
      %s110 = sphi 0, %s112
      %s113 = sphi 0, %s110
      %s114 = sphi 0, %s113
      %s130 = sphi 0, %s114
      %s134 = sphi 0, %s134
      %s136 = sphi 0, %s134
      %s137 = sphi 0, %s136
      %s151 = sphi 0, %s137
      %s155 = sphi 0, %s155
      %s157 = sphi 0, %s155
      %s158 = sphi 0, %s157
      %s172 = sphi 0, %s158
      %s176 = sphi 0, %s176
      %s178 = sphi 0, %s176
      %s179 = sphi 0, %s178
      %s193 = sphi 0, %s179
      %s197 = sphi 0, %s197
      %s199 = sphi 0, %s197
      %s200 = sphi 0, %s199
      %s214 = sphi 0, %s200
      %s222 = sphi 0, %s224
      %s225 = sphi 0, %s222
      %s226 = sphi 0, %s225
      %s242 = sphi 0, %s226
    $region4: #{tpu_custom_call.1} parent=1 // loop_header_branch
      %26 = sbr.rel (%p24) target = $region8
    $region5: #{tpu_custom_call.1} parent=1 // loop_body
      %s28 = ssub.s32 %s23, 1
      %s29 = ssub.s32 %s23, 2
      %s39 = sadd.s32 1, %s32
      %p40 = scmp.ge.s32.totalorder %s39, 2
      %s41 = scalar_select %p40, 0, %s39
      %s42 = sadd.s32 1, %s31
      %s43 = scalar_select %p40, %s42, %s31
      %p44 = scmp.ge.s32.totalorder %s43, 2
      %s45 = scalar_select %p44, 0, %s43
      %s46 = sadd.s32 1, %s30
      %s47 = scalar_select %p44, %s46, %s30
      %p48 = scmp.ge.s32.totalorder %s47, 2
      %s49 = scalar_select %p48, 0, %s47
      %s50 = ssub.s32 %s30, %s49
      %s51 = ssub.s32 %s31, %s45
      %s52 = sor.u32 %s50, %s51
      %p53 = scmp.eq.s32.totalorder %s52, 0
      %s55 = sadd.s32 %s54, 1
      %s56 = scalar_select %p53, %s54, %s55
      %p59 = pneg %p53
      %p60 = scmp.eq.s32.totalorder %s23, 7
      %p61 = por %p59, %p60
      %p62 = scmp.ne.s32.totalorder %s54, %s57
      %p63 = scmp.eq.s32.totalorder %s23, 0
      %p64 = por %p62, %p63
      %p65 = scmp.ne.s32.totalorder %s54, %s57
      %p66 = scmp.eq.s32.totalorder %s28, 7
      %p67 = por %p65, %p66
      %p68 = scmp.ne.s32.totalorder %s57, %s58
      %p69 = scmp.eq.s32.totalorder %s28, 0
      %p70 = por %p68, %p69
      %p71 = scmp.ne.s32.totalorder %s57, %s58
      %p72 = scmp.eq.s32.totalorder %s29, 7
      %p73 = por %p71, %p72
      %p75 = scmp.ne.s32.totalorder %s58, %s74
      %p76 = scmp.eq.s32.totalorder %s29, 0
      %p77 = por %p75, %p76
      %s78 = ssub.s32 %s30, %s49
      %s79 = ssub.s32 %s32, %s41
      %s80 = sor.u32 %s78, %s79
      %p81 = scmp.eq.s32.totalorder %s80, 0
      %s83 = sadd.s32 %s82, 1
      %s84 = scalar_select %p81, %s82, %s83
      %p87 = pneg %p81
      %p88 = scmp.eq.s32.totalorder %s23, 7
      %p89 = por %p87, %p88
      %p90 = scmp.ne.s32.totalorder %s82, %s85
      %p91 = scmp.eq.s32.totalorder %s23, 0
      %p92 = por %p90, %p91
      %p93 = scmp.ne.s32.totalorder %s82, %s85
      %p94 = scmp.eq.s32.totalorder %s28, 7
      %p95 = por %p93, %p94
      %p96 = scmp.ne.s32.totalorder %s85, %s86
      %p97 = scmp.eq.s32.totalorder %s28, 0
      %p98 = por %p96, %p97
      %p99 = scmp.ne.s32.totalorder %s85, %s86
      %p100 = scmp.eq.s32.totalorder %s29, 7
      %p101 = por %p99, %p100
      %p103 = scmp.ne.s32.totalorder %s86, %s102
      %p104 = scmp.eq.s32.totalorder %s29, 0
      %p105 = por %p103, %p104
      %s106 = ssub.s32 %s30, %s49
      %s107 = ssub.s32 %s32, %s41
      %s108 = sor.u32 %s106, %s107
      %p109 = scmp.eq.s32.totalorder %s108, 0
      %s111 = sadd.s32 %s110, 1
      %s112 = scalar_select %p109, %s110, %s111
      %p115 = pneg %p109
      %p116 = scmp.eq.s32.totalorder %s23, 7
      %p117 = por %p115, %p116
      %p118 = scmp.ne.s32.totalorder %s110, %s113
      %p119 = scmp.eq.s32.totalorder %s23, 0
      %p120 = por %p118, %p119
      %p121 = scmp.ne.s32.totalorder %s110, %s113
      %p122 = scmp.eq.s32.totalorder %s28, 7
      %p123 = por %p121, %p122
      %p124 = scmp.ne.s32.totalorder %s113, %s114
      %p125 = scmp.eq.s32.totalorder %s28, 0
      %p126 = por %p124, %p125
      %p127 = scmp.ne.s32.totalorder %s113, %s114
      %p128 = scmp.eq.s32.totalorder %s29, 7
      %p129 = por %p127, %p128
      %p131 = scmp.ne.s32.totalorder %s114, %s130
      %p132 = scmp.eq.s32.totalorder %s29, 0
      %p133 = por %p131, %p132
      %s135 = sadd.s32 %s134, 1
      %p138 = scmp.eq.s32.totalorder %s23, 7
      %p139 = scmp.ne.s32.totalorder %s134, %s136
      %p140 = scmp.eq.s32.totalorder %s23, 0
      %p141 = por %p139, %p140
      %p142 = scmp.ne.s32.totalorder %s134, %s136
      %p143 = scmp.eq.s32.totalorder %s28, 7
      %p144 = por %p142, %p143
      %p145 = scmp.ne.s32.totalorder %s136, %s137
      %p146 = scmp.eq.s32.totalorder %s28, 0
      %p147 = por %p145, %p146
      %p148 = scmp.ne.s32.totalorder %s136, %s137
      %p149 = scmp.eq.s32.totalorder %s29, 7
      %p150 = por %p148, %p149
      %p152 = scmp.ne.s32.totalorder %s137, %s151
      %p153 = scmp.eq.s32.totalorder %s29, 0
      %p154 = por %p152, %p153
      %s156 = sadd.s32 %s155, 1
      %p159 = scmp.eq.s32.totalorder %s23, 7
      %p160 = scmp.ne.s32.totalorder %s155, %s157
      %p161 = scmp.eq.s32.totalorder %s23, 0
      %p162 = por %p160, %p161
      %p163 = scmp.ne.s32.totalorder %s155, %s157
      %p164 = scmp.eq.s32.totalorder %s28, 7
      %p165 = por %p163, %p164
      %p166 = scmp.ne.s32.totalorder %s157, %s158
      %p167 = scmp.eq.s32.totalorder %s28, 0
      %p168 = por %p166, %p167
      %p169 = scmp.ne.s32.totalorder %s157, %s158
      %p170 = scmp.eq.s32.totalorder %s29, 7
      %p171 = por %p169, %p170
      %p173 = scmp.ne.s32.totalorder %s158, %s172
      %p174 = scmp.eq.s32.totalorder %s29, 0
      %p175 = por %p173, %p174
      %s177 = sadd.s32 %s176, 1
      %p180 = scmp.eq.s32.totalorder %s23, 7
      %p181 = scmp.ne.s32.totalorder %s176, %s178
      %p182 = scmp.eq.s32.totalorder %s23, 0
      %p183 = por %p181, %p182
      %p184 = scmp.ne.s32.totalorder %s176, %s178
      %p185 = scmp.eq.s32.totalorder %s28, 7
      %p186 = por %p184, %p185
      %p187 = scmp.ne.s32.totalorder %s178, %s179
      %p188 = scmp.eq.s32.totalorder %s28, 0
      %p189 = por %p187, %p188
      %p190 = scmp.ne.s32.totalorder %s178, %s179
      %p191 = scmp.eq.s32.totalorder %s29, 7
      %p192 = por %p190, %p191
      %p194 = scmp.ne.s32.totalorder %s179, %s193
      %p195 = scmp.eq.s32.totalorder %s29, 0
      %p196 = por %p194, %p195
      %s198 = sadd.s32 %s197, 1
      %p201 = scmp.eq.s32.totalorder %s23, 7
      %p202 = scmp.ne.s32.totalorder %s197, %s199
      %p203 = scmp.eq.s32.totalorder %s23, 0
      %p204 = por %p202, %p203
      %p205 = scmp.ne.s32.totalorder %s197, %s199
      %p206 = scmp.eq.s32.totalorder %s28, 7
      %p207 = por %p205, %p206
      %p208 = scmp.ne.s32.totalorder %s199, %s200
      %p209 = scmp.eq.s32.totalorder %s28, 0
      %p210 = por %p208, %p209
      %p211 = scmp.ne.s32.totalorder %s199, %s200
      %p212 = scmp.eq.s32.totalorder %s29, 7
      %p213 = por %p211, %p212
      %p215 = scmp.ne.s32.totalorder %s200, %s214
      %p216 = scmp.eq.s32.totalorder %s29, 0
      %p217 = por %p215, %p216
      %s218 = ssub.s32 %s30, %s49
      %s219 = ssub.s32 %s31, %s45
      %s220 = sor.u32 %s218, %s219
      %p221 = scmp.eq.s32.totalorder %s220, 0
      %s223 = sadd.s32 %s222, 1
      %s224 = scalar_select %p221, %s222, %s223
      %p227 = pneg %p221
      %p228 = scmp.eq.s32.totalorder %s23, 7
      %p229 = por %p227, %p228
      %p230 = scmp.ne.s32.totalorder %s222, %s225
      %p231 = scmp.eq.s32.totalorder %s23, 0
      %p232 = por %p230, %p231
      %p233 = scmp.ne.s32.totalorder %s222, %s225
      %p234 = scmp.eq.s32.totalorder %s28, 7
      %p235 = por %p233, %p234
      %p236 = scmp.ne.s32.totalorder %s225, %s226
      %p237 = scmp.eq.s32.totalorder %s28, 0
      %p238 = por %p236, %p237
      %p239 = scmp.ne.s32.totalorder %s225, %s226
      %p240 = scmp.eq.s32.totalorder %s29, 7
      %p241 = por %p239, %p240
      %p243 = scmp.ne.s32.totalorder %s226, %s242
      %p244 = scmp.eq.s32.totalorder %s29, 0
      %p245 = por %p243, %p244
      %p246 = scmp.le.s32.totalorder 1, %s23
      %p247 = scmp.lt.s32.totalorder %s23, 9
      %p248 = pnand %p246, %p247
      %p249 = pneg %p248
      // Predicated region
      $region9: #{tpu_custom_call.1} parent=5 // pred_check
        _
      $region10: #{tpu_custom_call.1} parent=5 // pred_check_branch
        %251 = sbr.rel (%p248) target = $region12
      $region11: #{tpu_custom_call.1} parent=5 // pred_region
        %s252 = ssub.s32 %s23, 1
        // Predicated region
        $region13: #{tpu_custom_call.1} parent=11 // pred_check
          %p253 = pneg %p147
        $region14: #{tpu_custom_call.1} parent=11 // pred_check_branch
          %255 = sbr.rel (%p253) target = $region16
        $region15: #{tpu_custom_call.1} parent=11 // pred_region
          %s257 = ssub.s32 3072, 3072
          %258 = vsyncadd [#allocation13], %s257
          %s259 = sshll.u32 [#allocation12], 4
          %s260 = int_to_ptr.vmem [resolvable:$true] %s259
          %265 = dma.hbm_to_vmem [thread:$0]  %s3, 3072, %s260, [#allocation13], 64, 64, 4
        $region16: #{tpu_custom_call.1} parent=11 // pred_fallthru
          _
        // Predicated region
        $region17: #{tpu_custom_call.1} parent=11 // pred_check
          %p266 = pneg %p168
        $region18: #{tpu_custom_call.1} parent=11 // pred_check_branch
          %268 = sbr.rel (%p266) target = $region20
        $region19: #{tpu_custom_call.1} parent=11 // pred_region
          _
        $region20: #{tpu_custom_call.1} parent=11 // pred_fallthru
          _
        // Predicated region
        $region21: #{tpu_custom_call.1} parent=11 // pred_check
          %p269 = pneg %p189
        $region22: #{tpu_custom_call.1} parent=11 // pred_check_branch
          %271 = sbr.rel (%p269) target = $region24
        $region23: #{tpu_custom_call.1} parent=11 // pred_region
          %s273 = ssub.s32 1024, 1024
          %274 = vsyncadd [#allocation13], %s273
          %s275 = sshll.u32 [#allocation14], 4
          %s276 = int_to_ptr.vmem [resolvable:$true] %s275
          %281 = dma.hbm_to_vmem [thread:$0]  %s5, 1024, %s276, [#allocation13], 64, 64, 4
        $region24: #{tpu_custom_call.1} parent=11 // pred_fallthru
          _
        // Predicated region
        $region25: #{tpu_custom_call.1} parent=11 // pred_check
          %p282 = pneg %p210
        $region26: #{tpu_custom_call.1} parent=11 // pred_check_branch
          %284 = sbr.rel (%p282) target = $region28
        $region27: #{tpu_custom_call.1} parent=11 // pred_region
          _
        $region28: #{tpu_custom_call.1} parent=11 // pred_fallthru
          _
      $region12: #{tpu_custom_call.1} parent=5 // pred_fallthru
        _
      %p285 = scmp.lt.s32.totalorder %s23, 8
      // Predicated region
      $region29: #{tpu_custom_call.1} parent=5 // pred_check
        %p286 = pneg %p285
      $region30: #{tpu_custom_call.1} parent=5 // pred_check_branch
        %288 = sbr.rel (%p286) target = $region32
      $region31: #{tpu_custom_call.1} parent=5 // pred_region
        // Predicated region
        $region33: #{tpu_custom_call.1} parent=31 // pred_check
          %p289 = pneg %p64
        $region34: #{tpu_custom_call.1} parent=31 // pred_check_branch
          %291 = sbr.rel (%p289) target = $region36
        $region35: #{tpu_custom_call.1} parent=31 // pred_region
          %s292 = sand.u32 %s54, 1
          %s293 = scalar_lea.sflag [#allocation7], %s292
          %s294 = sand.u32 %s54, 1
          %s295 = smul.addr %s294, 8
          %s296 = scalar_lea.vmem [#allocation6], %s295
          %s298 = ssub.s32 128, 128
          %299 = vsyncadd %s293, %s298
          %s300 = smul.addr %s30, 2
          %s301 = sadd.s32 %s31, %s300
          %s302 = smul.addr %s301, 128
          %s303 = scalar_lea.hbm %s0, %s302
          %s305 = sshll.u32 %s296, 4
          %s306 = int_to_ptr.vmem [resolvable:$true] %s305
          %308 = dma.hbm_to_vmem [thread:$0]  %s303, 128, %s306, %s293
        $region36: #{tpu_custom_call.1} parent=31 // pred_fallthru
          _
        // Predicated region
        $region37: #{tpu_custom_call.1} parent=31 // pred_check
          %p309 = pneg %p92
        $region38: #{tpu_custom_call.1} parent=31 // pred_check_branch
          %311 = sbr.rel (%p309) target = $region40
        $region39: #{tpu_custom_call.1} parent=31 // pred_region
          %s312 = sand.u32 %s23, 1
          %s313 = scalar_lea.sflag [#allocation10], %s312
          %s314 = sand.u32 %s82, 1
          %s315 = smul.addr %s314, 8
          %s316 = scalar_lea.vmem [#allocation9], %s315
          %s318 = ssub.s32 128, 128
          %319 = vsyncadd %s313, %s318
          %s320 = smul.addr %s30, 2
          %s321 = sadd.s32 %s32, %s320
          %s322 = smul.addr %s321, 128
          %s323 = scalar_lea.hbm %s1, %s322
          %s325 = sshll.u32 %s316, 4
          %s326 = int_to_ptr.vmem [resolvable:$true] %s325
          %328 = dma.hbm_to_vmem [thread:$0]  %s323, 128, %s326, %s313
        $region40: #{tpu_custom_call.1} parent=31 // pred_fallthru
          _
        // Predicated region
        $region41: #{tpu_custom_call.1} parent=31 // pred_check
          %p329 = pneg %p120
        $region42: #{tpu_custom_call.1} parent=31 // pred_check_branch
          %331 = sbr.rel (%p329) target = $region44
        $region43: #{tpu_custom_call.1} parent=31 // pred_region
          %s332 = sand.u32 %s23, 1
          %s333 = scalar_lea.sflag [#allocation10], %s332
          %s334 = sand.u32 %s110, 1
          %s335 = smul.addr %s334, 8
          %s336 = scalar_lea.vmem [#allocation11], %s335
          %s338 = ssub.s32 128, 128
          %339 = vsyncadd %s333, %s338
          %s340 = smul.addr %s30, 2
          %s341 = sadd.s32 %s32, %s340
          %s342 = smul.addr %s341, 128
          %s343 = scalar_lea.hbm %s2, %s342
          %s345 = sshll.u32 %s336, 4
          %s346 = int_to_ptr.vmem [resolvable:$true] %s345
          %348 = dma.hbm_to_vmem [thread:$0]  %s343, 128, %s346, %s333
        $region44: #{tpu_custom_call.1} parent=31 // pred_fallthru
          _
      $region32: #{tpu_custom_call.1} parent=5 // pred_fallthru
        _
      %p349 = scmp.le.s32.totalorder 1, %s23
      %p350 = scmp.lt.s32.totalorder %s23, 9
      %p351 = pnand %p349, %p350
      %p352 = pneg %p351
      // Predicated region
      $region45: #{tpu_custom_call.1} parent=5 // pred_check
        _
      $region46: #{tpu_custom_call.1} parent=5 // pred_check_branch
        %354 = sbr.rel (%p351) target = $region48
      $region47: #{tpu_custom_call.1} parent=5 // pred_region
        %s355 = ssub.s32 %s23, 1
        %s356 = sand.u32 %s57, 1
        %s357 = scalar_lea.sflag [#allocation7], %s356
        %s358 = sand.u32 %s57, 1
        %s359 = smul.addr %s358, 8
        %s360 = scalar_lea.vmem [#allocation6], %s359
        // Predicated region
        $region49: #{tpu_custom_call.1} parent=47 // pred_check
          %p361 = pneg %p70
        $region50: #{tpu_custom_call.1} parent=47 // pred_check_branch
          %363 = sbr.rel (%p361) target = $region52
        $region51: #{tpu_custom_call.1} parent=47 // pred_region
          %364 = dma.done %s357, 128
        $region52: #{tpu_custom_call.1} parent=47 // pred_fallthru
          _
        %s365 = sand.u32 %s28, 1
        %s366 = scalar_lea.sflag [#allocation10], %s365
        %s367 = sand.u32 %s85, 1
        %s368 = smul.addr %s367, 8
        %s369 = scalar_lea.vmem [#allocation9], %s368
        // Predicated region
        $region53: #{tpu_custom_call.1} parent=47 // pred_check
          %p370 = pneg %p98
        $region54: #{tpu_custom_call.1} parent=47 // pred_check_branch
          %372 = sbr.rel (%p370) target = $region56
        $region55: #{tpu_custom_call.1} parent=47 // pred_region
          %373 = dma.done %s366, 128
        $region56: #{tpu_custom_call.1} parent=47 // pred_fallthru
          _
        %s374 = sand.u32 %s28, 1
        %s375 = scalar_lea.sflag [#allocation10], %s374
        %s376 = sand.u32 %s113, 1
        %s377 = smul.addr %s376, 8
        %s378 = scalar_lea.vmem [#allocation11], %s377
        // Predicated region
        $region57: #{tpu_custom_call.1} parent=47 // pred_check
          %p379 = pneg %p126
        $region58: #{tpu_custom_call.1} parent=47 // pred_check_branch
          %381 = sbr.rel (%p379) target = $region60
        $region59: #{tpu_custom_call.1} parent=47 // pred_region
          %382 = dma.done %s375, 128
        $region60: #{tpu_custom_call.1} parent=47 // pred_fallthru
          _
        // Predicated region
        $region61: #{tpu_custom_call.1} parent=47 // pred_check
          %p383 = pneg %p147
        $region62: #{tpu_custom_call.1} parent=47 // pred_check_branch
          %385 = sbr.rel (%p383) target = $region64
        $region63: #{tpu_custom_call.1} parent=47 // pred_region
          %386 = dma.done [#allocation13], 3072
        $region64: #{tpu_custom_call.1} parent=47 // pred_fallthru
          _
        // Predicated region
        $region65: #{tpu_custom_call.1} parent=47 // pred_check
          %p387 = pneg %p189
        $region66: #{tpu_custom_call.1} parent=47 // pred_check_branch
          %389 = sbr.rel (%p387) target = $region68
        $region67: #{tpu_custom_call.1} parent=47 // pred_region
          %390 = dma.done [#allocation13], 1024
        $region68: #{tpu_custom_call.1} parent=47 // pred_fallthru
          _
        %s391 = sand.u32 %s57, 1
        %s392 = scalar_lea.sflag [#allocation7], %s391
        %s393 = sand.u32 %s57, 1
        %s394 = smul.addr %s393, 8
        %s395 = scalar_lea.vmem [#allocation6], %s394
        %p396 = pneg %p70
        %p397 = pneg %p67
        %s398 = sand.u32 %s28, 1
        %s399 = scalar_lea.sflag [#allocation10], %s398
        %s400 = sand.u32 %s85, 1
        %s401 = smul.addr %s400, 8
        %s402 = scalar_lea.vmem [#allocation9], %s401
        %p403 = pneg %p98
        %p404 = pneg %p95
        %s405 = sand.u32 %s28, 1
        %s406 = scalar_lea.sflag [#allocation10], %s405
        %s407 = sand.u32 %s113, 1
        %s408 = smul.addr %s407, 8
        %s409 = scalar_lea.vmem [#allocation11], %s408
        %p410 = pneg %p126
        %p411 = pneg %p123
        %p412 = pneg %p147
        %p413 = pneg %p144
        %p414 = pneg %p168
        %p415 = pneg %p165
        %p416 = pneg %p189
        %p417 = pneg %p186
        %p418 = pneg %p210
        %p419 = pneg %p207
        %p420 = pneg %p238
        %p421 = pneg %p235
        %s422 = sand.u32 %s225, 1
        %s423 = scalar_lea.sflag [#allocation8], %s422
        %s424 = sand.u32 %s225, 1
        %s425 = smul.addr %s424, 8
        %s426 = scalar_lea.vmem [#allocation15], %s425
        %p428 = scmp.eq.s32.totalorder %s35, 0
        // Predicated region
        $region69: #{tpu_custom_call.1} parent=47 // pred_check
          %p429 = pneg %p428
        $region70: #{tpu_custom_call.1} parent=47 // pred_check_branch
          %431 = sbr.rel (%p429) target = $region72
        $region71: #{tpu_custom_call.1} parent=47 // pred_region
          %v432 = vld [vmem:[%s360] sm:$0xff]
          %v433 = vpack.c.bf16 %v432, %v432
          %v434 = vld [vmem:[#allocation12] sm:$0xf]
          %v435 = vld [vmem:[#allocation12 + $0x4] sm:$0xf]
          %v436 = vld [vmem:[#allocation12 + $0x8] sm:$0xf]
          %v437 = vld [vmem:[#allocation12 + $0xc] sm:$0xf]
          %v438 = vld [vmem:[#allocation12 + $0x10] sm:$0xf]
          %v439 = vld [vmem:[#allocation12 + $0x14] sm:$0xf]
          %v440 = vld [vmem:[#allocation12 + $0x18] sm:$0xf]
          %v441 = vld [vmem:[#allocation12 + $0x1c] sm:$0xf]
          %v442 = vld [vmem:[#allocation12 + $0x20] sm:$0xf]
          %v443 = vld [vmem:[#allocation12 + $0x24] sm:$0xf]
          %v444 = vld [vmem:[#allocation12 + $0x28] sm:$0xf]
          %v445 = vld [vmem:[#allocation12 + $0x2c] sm:$0xf]
          %v446 = vld [vmem:[#allocation12 + $0x30] sm:$0xf]
          %v447 = vld [vmem:[#allocation12 + $0x34] sm:$0xf]
          %v448 = vld [vmem:[#allocation12 + $0x38] sm:$0xf]
          %v449 = vld [vmem:[#allocation12 + $0x3c] sm:$0xf]
          %v450 = vld [vmem:[%s4] sm:$0x1]
          %v452 = vlaneseq
          %v453 = vshrl.u32 %v452, 7
          %v454 = vsub.s32 0, %v453
          %v455 = vrot.slane %v450, %v454
          %v473 = vunpack.c.l.b16 %v434
          %v474 = vunpack.c.l.b16 %v435
          %v475 = vunpack.c.l.b16 %v436
          %v476 = vunpack.c.l.b16 %v437
          %v477 = vunpack.c.l.b16 %v438
          %v478 = vunpack.c.l.b16 %v439
          %v479 = vunpack.c.l.b16 %v440
          %v480 = vunpack.c.l.b16 %v441
          %v481 = vunpack.c.l.b16 %v442
          %v482 = vunpack.c.l.b16 %v443
          %v483 = vunpack.c.l.b16 %v444
          %v484 = vunpack.c.l.b16 %v445
          %v485 = vunpack.c.l.b16 %v446
          %v486 = vunpack.c.l.b16 %v447
          %v487 = vunpack.c.l.b16 %v448
          %v488 = vunpack.c.l.b16 %v449
          %v489 = vpack.c.b16 %v474, %v473
          %v490 = vpack.c.b16 %v476, %v475
          %v491 = vpack.c.b16 %v478, %v477
          %v492 = vpack.c.b16 %v480, %v479
          %v493 = vpack.c.b16 %v482, %v481
          %v494 = vpack.c.b16 %v484, %v483
          %v495 = vpack.c.b16 %v486, %v485
          %v496 = vpack.c.b16 %v488, %v487
          %505 = vmatprep.subr.bf16.mxu0 0
          %506 = vmatpush1.bf16.msra.mxu0 %v489
          %507 = vmatprep.subr.bf16.mxu0 0
          %508 = vmatpush1.bf16.msra.mxu0 %v490
          %509 = vmatprep.subr.bf16.mxu0 0
          %510 = vmatpush1.bf16.msra.mxu0 %v491
          %511 = vmatprep.subr.bf16.mxu0 0
          %512 = vmatpush1.bf16.msra.mxu0 %v492
          %513 = vmatprep.subr.bf16.mxu0 0
          %514 = vmatpush1.bf16.msra.mxu0 %v493
          %515 = vmatprep.subr.bf16.mxu0 0
          %516 = vmatpush1.bf16.msra.mxu0 %v494
          %517 = vmatprep.subr.bf16.mxu0 0
          %518 = vmatpush1.bf16.msra.mxu0 %v495
          %519 = vmatprep.subr.bf16.mxu0 0
          %520 = vmatpush1.bf16.msra.mxu0 %v496
          %521 = vmatprep.subr.bf16.mxu0 0
          %522 = vmatpush1.bf16.msra.mxu0 0
          %523 = vmatprep.subr.bf16.mxu0 0
          %524 = vmatpush1.bf16.msra.mxu0 0
          %525 = vmatprep.subr.bf16.mxu0 0
          %526 = vmatpush1.bf16.msra.mxu0 0
          %527 = vmatprep.subr.bf16.mxu0 0
          %528 = vmatpush1.bf16.msra.mxu0 0
          %529 = vmatprep.subr.bf16.mxu0 0
          %530 = vmatpush1.bf16.msra.mxu0 0
          %531 = vmatprep.subr.bf16.mxu0 0
          %532 = vmatpush1.bf16.msra.mxu0 0
          %533 = vmatprep.subr.bf16.mxu0 0
          %534 = vmatpush1.bf16.msra.mxu0 0
          %535 = vmatprep.subr.bf16.mxu0 0
          %536 = vmatpush1.bf16.msra.mxu0 0
          %537 = vmatprep.mubr.bf16.mxu0 0
          %538 = vmatmul.mubr.bf16.gmra.mrb[0].mxu0 %v433
          %v539 = vpop.f32.mrb[0].mxu0
          %v540 = vadd.f32 %v455, %v539
          %v541 = vpop.f32.mrb[0].mxu0
          %v542 = vpop.f32.mrb[0].mxu0
          %v543 = vpop.f32.mrb[0].mxu0
          %544 = vdwg.mxu0
          %v545 = vpack.c.bf16 %v540, %v540
          %546 = vst [vmem:[#allocation2] sm:$0xf] %v545
          %vm547 = vcmask 64512
          %548 = vst.msk [vmem:[#allocation3] sm:$0xff] %vm547, -1e+30
          %549 = vst.msk [vmem:[#allocation4] sm:$0xff] %vm547, 0.0
          %550 = vst [vmem:[#allocation5] sm:$0xff] 0.0
        $region72: #{tpu_custom_call.1} parent=47 // pred_fallthru
          _
        %v551 = vld [vmem:[%s369] sm:$0xff]
        %v552 = vpack.c.bf16 %v551, %v551
        %v553 = vld [vmem:[%s378] sm:$0xff]
        %v554 = vpack.c.bf16 %v553, %v553
        %s555 = scalar_lea.vmem [#allocation12], 64
        %v556 = vld [vmem:[%s555] sm:$0xf]
        %v557 = vld [vmem:[%s555 + $0x4] sm:$0xf]
        %v558 = vld [vmem:[%s555 + $0x8] sm:$0xf]
        %v559 = vld [vmem:[%s555 + $0xc] sm:$0xf]
        %v560 = vld [vmem:[%s555 + $0x10] sm:$0xf]
        %v561 = vld [vmem:[%s555 + $0x14] sm:$0xf]
        %v562 = vld [vmem:[%s555 + $0x18] sm:$0xf]
        %v563 = vld [vmem:[%s555 + $0x1c] sm:$0xf]
        %v564 = vld [vmem:[%s555 + $0x20] sm:$0xf]
        %v565 = vld [vmem:[%s555 + $0x24] sm:$0xf]
        %v566 = vld [vmem:[%s555 + $0x28] sm:$0xf]
        %v567 = vld [vmem:[%s555 + $0x2c] sm:$0xf]
        %v568 = vld [vmem:[%s555 + $0x30] sm:$0xf]
        %v569 = vld [vmem:[%s555 + $0x34] sm:$0xf]
        %v570 = vld [vmem:[%s555 + $0x38] sm:$0xf]
        %v571 = vld [vmem:[%s555 + $0x3c] sm:$0xf]
        %s572 = scalar_lea.vmem %s4, 1
        %v573 = vld [vmem:[%s572] sm:$0x1]
        %v575 = vlaneseq
        %v576 = vshrl.u32 %v575, 7
        %v577 = vsub.s32 0, %v576
        %v578 = vrot.slane %v573, %v577
        %v596 = vunpack.c.l.b16 %v556
        %v597 = vunpack.c.l.b16 %v557
        %v598 = vunpack.c.l.b16 %v558
        %v599 = vunpack.c.l.b16 %v559
        %v600 = vunpack.c.l.b16 %v560
        %v601 = vunpack.c.l.b16 %v561
        %v602 = vunpack.c.l.b16 %v562
        %v603 = vunpack.c.l.b16 %v563
        %v604 = vunpack.c.l.b16 %v564
        %v605 = vunpack.c.l.b16 %v565
        %v606 = vunpack.c.l.b16 %v566
        %v607 = vunpack.c.l.b16 %v567
        %v608 = vunpack.c.l.b16 %v568
        %v609 = vunpack.c.l.b16 %v569
        %v610 = vunpack.c.l.b16 %v570
        %v611 = vunpack.c.l.b16 %v571
        %v612 = vpack.c.b16 %v597, %v596
        %v613 = vpack.c.b16 %v599, %v598
        %v614 = vpack.c.b16 %v601, %v600
        %v615 = vpack.c.b16 %v603, %v602
        %v616 = vpack.c.b16 %v605, %v604
        %v617 = vpack.c.b16 %v607, %v606
        %v618 = vpack.c.b16 %v609, %v608
        %v619 = vpack.c.b16 %v611, %v610
        %628 = vmatprep.subr.bf16.mxu0 0
        %629 = vmatpush1.bf16.msra.mxu0 %v612
        %630 = vmatprep.subr.bf16.mxu0 0
        %631 = vmatpush1.bf16.msra.mxu0 %v613
        %632 = vmatprep.subr.bf16.mxu0 0
        %633 = vmatpush1.bf16.msra.mxu0 %v614
        %634 = vmatprep.subr.bf16.mxu0 0
        %635 = vmatpush1.bf16.msra.mxu0 %v615
        %636 = vmatprep.subr.bf16.mxu0 0
        %637 = vmatpush1.bf16.msra.mxu0 %v616
        %638 = vmatprep.subr.bf16.mxu0 0
        %639 = vmatpush1.bf16.msra.mxu0 %v617
        %640 = vmatprep.subr.bf16.mxu0 0
        %641 = vmatpush1.bf16.msra.mxu0 %v618
        %642 = vmatprep.subr.bf16.mxu0 0
        %643 = vmatpush1.bf16.msra.mxu0 %v619
        %644 = vmatprep.subr.bf16.mxu0 0
        %645 = vmatpush1.bf16.msra.mxu0 0
        %646 = vmatprep.subr.bf16.mxu0 0
        %647 = vmatpush1.bf16.msra.mxu0 0
        %648 = vmatprep.subr.bf16.mxu0 0
        %649 = vmatpush1.bf16.msra.mxu0 0
        %650 = vmatprep.subr.bf16.mxu0 0
        %651 = vmatpush1.bf16.msra.mxu0 0
        %652 = vmatprep.subr.bf16.mxu0 0
        %653 = vmatpush1.bf16.msra.mxu0 0
        %654 = vmatprep.subr.bf16.mxu0 0
        %655 = vmatpush1.bf16.msra.mxu0 0
        %656 = vmatprep.subr.bf16.mxu0 0
        %657 = vmatpush1.bf16.msra.mxu0 0
        %658 = vmatprep.subr.bf16.mxu0 0
        %659 = vmatpush1.bf16.msra.mxu0 0
        %660 = vmatprep.mubr.bf16.mxu0 0
        %661 = vmatmul.mubr.bf16.gmra.mrb[0].mxu0 %v552
        %v662 = vpop.f32.mrb[0].mxu0
        %v663 = vadd.f32 %v578, %v662
        %v664 = vpop.f32.mrb[0].mxu0
        %v665 = vpop.f32.mrb[0].mxu0
        %v666 = vpop.f32.mrb[0].mxu0
        %667 = vdwg.mxu0
        %v668 = vpack.c.bf16 %v663, %v663
        %s669 = scalar_lea.vmem [#allocation12], 128
        %v670 = vld [vmem:[%s669] sm:$0xf]
        %v671 = vld [vmem:[%s669 + $0x4] sm:$0xf]
        %v672 = vld [vmem:[%s669 + $0x8] sm:$0xf]
        %v673 = vld [vmem:[%s669 + $0xc] sm:$0xf]
        %v674 = vld [vmem:[%s669 + $0x10] sm:$0xf]
        %v675 = vld [vmem:[%s669 + $0x14] sm:$0xf]
        %v676 = vld [vmem:[%s669 + $0x18] sm:$0xf]
        %v677 = vld [vmem:[%s669 + $0x1c] sm:$0xf]
        %v678 = vld [vmem:[%s669 + $0x20] sm:$0xf]
        %v679 = vld [vmem:[%s669 + $0x24] sm:$0xf]
        %v680 = vld [vmem:[%s669 + $0x28] sm:$0xf]
        %v681 = vld [vmem:[%s669 + $0x2c] sm:$0xf]
        %v682 = vld [vmem:[%s669 + $0x30] sm:$0xf]
        %v683 = vld [vmem:[%s669 + $0x34] sm:$0xf]
        %v684 = vld [vmem:[%s669 + $0x38] sm:$0xf]
        %v685 = vld [vmem:[%s669 + $0x3c] sm:$0xf]
        %s686 = scalar_lea.vmem %s4, 2
        %v687 = vld [vmem:[%s686] sm:$0x1]
        %v689 = vlaneseq
        %v690 = vshrl.u32 %v689, 7
        %v691 = vsub.s32 0, %v690
        %v692 = vrot.slane %v687, %v691
        %v710 = vunpack.c.l.b16 %v670
        %v711 = vunpack.c.l.b16 %v671
        %v712 = vunpack.c.l.b16 %v672
        %v713 = vunpack.c.l.b16 %v673
        %v714 = vunpack.c.l.b16 %v674
        %v715 = vunpack.c.l.b16 %v675
        %v716 = vunpack.c.l.b16 %v676
        %v717 = vunpack.c.l.b16 %v677
        %v718 = vunpack.c.l.b16 %v678
        %v719 = vunpack.c.l.b16 %v679
        %v720 = vunpack.c.l.b16 %v680
        %v721 = vunpack.c.l.b16 %v681
        %v722 = vunpack.c.l.b16 %v682
        %v723 = vunpack.c.l.b16 %v683
        %v724 = vunpack.c.l.b16 %v684
        %v725 = vunpack.c.l.b16 %v685
        %v726 = vpack.c.b16 %v711, %v710
        %v727 = vpack.c.b16 %v713, %v712
        %v728 = vpack.c.b16 %v715, %v714
        %v729 = vpack.c.b16 %v717, %v716
        %v730 = vpack.c.b16 %v719, %v718
        %v731 = vpack.c.b16 %v721, %v720
        %v732 = vpack.c.b16 %v723, %v722
        %v733 = vpack.c.b16 %v725, %v724
        %742 = vmatprep.subr.bf16.mxu0 0
        %743 = vmatpush1.bf16.msra.mxu0 %v726
        %744 = vmatprep.subr.bf16.mxu0 0
        %745 = vmatpush1.bf16.msra.mxu0 %v727
        %746 = vmatprep.subr.bf16.mxu0 0
        %747 = vmatpush1.bf16.msra.mxu0 %v728
        %748 = vmatprep.subr.bf16.mxu0 0
        %749 = vmatpush1.bf16.msra.mxu0 %v729
        %750 = vmatprep.subr.bf16.mxu0 0
        %751 = vmatpush1.bf16.msra.mxu0 %v730
        %752 = vmatprep.subr.bf16.mxu0 0
        %753 = vmatpush1.bf16.msra.mxu0 %v731
        %754 = vmatprep.subr.bf16.mxu0 0
        %755 = vmatpush1.bf16.msra.mxu0 %v732
        %756 = vmatprep.subr.bf16.mxu0 0
        %757 = vmatpush1.bf16.msra.mxu0 %v733
        %758 = vmatprep.subr.bf16.mxu0 0
        %759 = vmatpush1.bf16.msra.mxu0 0
        %760 = vmatprep.subr.bf16.mxu0 0
        %761 = vmatpush1.bf16.msra.mxu0 0
        %762 = vmatprep.subr.bf16.mxu0 0
        %763 = vmatpush1.bf16.msra.mxu0 0
        %764 = vmatprep.subr.bf16.mxu0 0
        %765 = vmatpush1.bf16.msra.mxu0 0
        %766 = vmatprep.subr.bf16.mxu0 0
        %767 = vmatpush1.bf16.msra.mxu0 0
        %768 = vmatprep.subr.bf16.mxu0 0
        %769 = vmatpush1.bf16.msra.mxu0 0
        %770 = vmatprep.subr.bf16.mxu0 0
        %771 = vmatpush1.bf16.msra.mxu0 0
        %772 = vmatprep.subr.bf16.mxu0 0
        %773 = vmatpush1.bf16.msra.mxu0 0
        %774 = vmatprep.mubr.bf16.mxu0 0
        %775 = vmatmul.mubr.bf16.gmra.mrb[0].mxu0 %v554
        %v776 = vpop.f32.mrb[0].mxu0
        %v777 = vadd.f32 %v692, %v776
        %v778 = vpop.f32.mrb[0].mxu0
        %v779 = vpop.f32.mrb[0].mxu0
        %v780 = vpop.f32.mrb[0].mxu0
        %781 = vdwg.mxu0
        %v782 = vpack.c.bf16 %v777, %v777
        %v783 = vld [vmem:[#allocation2] sm:$0xf]
        %vm784 = vcmask 130048
        %v786 = vsel %vm784, %v783, 0
        %v789 = vsel %vm784, %v668, 0
        %791 = vmatprep.subr.bf16.mxu0 0
        %792 = vmatpush1.bf16.xpose.msra.mxu0 %v789
        %793 = vmatprep.subr.bf16.mxu0 0
        %794 = vmatpush1.bf16.xpose.msra.mxu0 0
        %795 = vmatprep.subr.bf16.mxu0 0
        %796 = vmatpush1.bf16.xpose.msra.mxu0 0
        %797 = vmatprep.subr.bf16.mxu0 0
        %798 = vmatpush1.bf16.xpose.msra.mxu0 0
        %799 = vmatprep.subr.bf16.mxu0 0
        %800 = vmatpush1.bf16.xpose.msra.mxu0 0
        %801 = vmatprep.subr.bf16.mxu0 0
        %802 = vmatpush1.bf16.xpose.msra.mxu0 0
        %803 = vmatprep.subr.bf16.mxu0 0
        %804 = vmatpush1.bf16.xpose.msra.mxu0 0
        %805 = vmatprep.subr.bf16.mxu0 0
        %806 = vmatpush1.bf16.xpose.msra.mxu0 0
        %807 = vmatprep.subr.bf16.mxu0 0
        %808 = vmatpush1.bf16.xpose.msra.mxu0 0
        %809 = vmatprep.subr.bf16.mxu0 0
        %810 = vmatpush1.bf16.xpose.msra.mxu0 0
        %811 = vmatprep.subr.bf16.mxu0 0
        %812 = vmatpush1.bf16.xpose.msra.mxu0 0
        %813 = vmatprep.subr.bf16.mxu0 0
        %814 = vmatpush1.bf16.xpose.msra.mxu0 0
        %815 = vmatprep.subr.bf16.mxu0 0
        %816 = vmatpush1.bf16.xpose.msra.mxu0 0
        %817 = vmatprep.subr.bf16.mxu0 0
        %818 = vmatpush1.bf16.xpose.msra.mxu0 0
        %819 = vmatprep.subr.bf16.mxu0 0
        %820 = vmatpush1.bf16.xpose.msra.mxu0 0
        %821 = vmatprep.subr.bf16.mxu0 0
        %822 = vmatpush1.bf16.xpose.msra.mxu0 0
        %823 = vmatprep.mubr.bf16.mxu0 0
        %824 = vmatmul.mubr.bf16.gmra.mrb[0].mxu0 %v786
        %v825 = vpop.f32.mrb[0].mxu0
        %v826 = vadd.f32 0.0, %v825
        %v827 = vpop.f32.mrb[0].mxu0
        %v828 = vpop.f32.mrb[0].mxu0
        %v829 = vpop.f32.mrb[0].mxu0
        %830 = vdwg.mxu0
        %v831 = vld [vmem:[#allocation3] sm:$0xff]
        %vm832 = vcmask 64512
        %v833 = vsel %vm832, %v826, -inf
        %834 = vmax.xlane.f32.xlu0 %v833
        %v835 = vpop.xlane.xlu0 %834
        %v836 = vmax.f32 %v831, %v835
        %v837 = vsub.f32 %v831, %v836
        %v838 = vmul.f32 %v837, 1.442695
        %v839 = vpow.pop %v838
        %841 = vset.pattern.permute.xlu0 0
        %842 = vperm.xlu0 %841, %v836
        %v843 = vpop.permute.xlu0 %842
        %v845 = vsub.f32 %v826, %v843
        %v846 = vmul.f32 %v845, 1.442695
        %v847 = vpow.pop %v846
        %v848 = vld [vmem:[#allocation4] sm:$0xff]
        %v849 = vmul.f32 %v839, %v848
        %v850 = vsel %vm832, %v847, 0.0
        %851 = vadd.xlane.f32.xlu0 %v850
        %v852 = vpop.xlane.xlu0 %851
        %v853 = vadd.f32 %v849, %v852
        %vm854 = vcmask 7168
        %855 = vst.msk [vmem:[#allocation4] sm:$0xff] %vm854, %v853
        %856 = vst.msk [vmem:[#allocation3] sm:$0xff] %vm854, %v836
        %v857 = vld [vmem:[#allocation5] sm:$0xff]
        %859 = vset.pattern.permute.xlu0 0
        %860 = vperm.xlu0 %859, %v839
        %v861 = vpop.permute.xlu0 %860
        %v863 = vmul.f32 %v861, %v857
        %v864 = vpack.c.bf16 %v847, %v847
        %v866 = vsel %vm832, %v864, 0
        %vm868 = vcmask 1043456
        %v870 = vsel %vm868, %v782, 0
        %872 = vmatprep.subr.bf16.mxu0 0
        %873 = vmatpush1.bf16.msra.mxu0 %v870
        %874 = vmatprep.subr.bf16.mxu0 0
        %875 = vmatpush1.bf16.msra.mxu0 0
        %876 = vmatprep.subr.bf16.mxu0 0
        %877 = vmatpush1.bf16.msra.mxu0 0
        %878 = vmatprep.subr.bf16.mxu0 0
        %879 = vmatpush1.bf16.msra.mxu0 0
        %880 = vmatprep.subr.bf16.mxu0 0
        %881 = vmatpush1.bf16.msra.mxu0 0
        %882 = vmatprep.subr.bf16.mxu0 0
        %883 = vmatpush1.bf16.msra.mxu0 0
        %884 = vmatprep.subr.bf16.mxu0 0
        %885 = vmatpush1.bf16.msra.mxu0 0
        %886 = vmatprep.subr.bf16.mxu0 0
        %887 = vmatpush1.bf16.msra.mxu0 0
        %888 = vmatprep.subr.bf16.mxu0 0
        %889 = vmatpush1.bf16.msra.mxu0 0
        %890 = vmatprep.subr.bf16.mxu0 0
        %891 = vmatpush1.bf16.msra.mxu0 0
        %892 = vmatprep.subr.bf16.mxu0 0
        %893 = vmatpush1.bf16.msra.mxu0 0
        %894 = vmatprep.subr.bf16.mxu0 0
        %895 = vmatpush1.bf16.msra.mxu0 0
        %896 = vmatprep.subr.bf16.mxu0 0
        %897 = vmatpush1.bf16.msra.mxu0 0
        %898 = vmatprep.subr.bf16.mxu0 0
        %899 = vmatpush1.bf16.msra.mxu0 0
        %900 = vmatprep.subr.bf16.mxu0 0
        %901 = vmatpush1.bf16.msra.mxu0 0
        %902 = vmatprep.subr.bf16.mxu0 0
        %903 = vmatpush1.bf16.msra.mxu0 0
        %904 = vmatprep.mubr.bf16.mxu0 0
        %905 = vmatmul.mubr.bf16.gmra.mrb[0].mxu0 %v866
        %v906 = vpop.f32.mrb[0].mxu0
        %v907 = vadd.f32 0.0, %v906
        %v908 = vpop.f32.mrb[0].mxu0
        %v909 = vpop.f32.mrb[0].mxu0
        %v910 = vpop.f32.mrb[0].mxu0
        %911 = vdwg.mxu0
        %v912 = vadd.f32 %v863, %v907
        %913 = vst.msk [vmem:[#allocation5] sm:$0xff] %vm784, %v912
        %v914 = vld [vmem:[#allocation2] sm:$0xf]
        %v916 = vunpack.c.l.b16 %v914
        %v917 = vpack.c.b16 %v916, %v916
        %918 = vrot.lane.b32.xlu0 %v917, 112
        %v919 = vpop.permute.xlu0 %918
        %921 = vrot.lane.b32.xlu0 %v668, 112
        %v922 = vpop.permute.xlu0 %921
        %v924 = vsel %vm784, %v919, 0
        %v927 = vsel %vm784, %v922, 0
        %929 = vmatprep.subr.bf16.mxu0 0
        %930 = vmatpush1.bf16.xpose.msra.mxu0 %v927
        %931 = vmatprep.subr.bf16.mxu0 0
        %932 = vmatpush1.bf16.xpose.msra.mxu0 0
        %933 = vmatprep.subr.bf16.mxu0 0
        %934 = vmatpush1.bf16.xpose.msra.mxu0 0
        %935 = vmatprep.subr.bf16.mxu0 0
        %936 = vmatpush1.bf16.xpose.msra.mxu0 0
        %937 = vmatprep.subr.bf16.mxu0 0
        %938 = vmatpush1.bf16.xpose.msra.mxu0 0
        %939 = vmatprep.subr.bf16.mxu0 0
        %940 = vmatpush1.bf16.xpose.msra.mxu0 0
        %941 = vmatprep.subr.bf16.mxu0 0
        %942 = vmatpush1.bf16.xpose.msra.mxu0 0
        %943 = vmatprep.subr.bf16.mxu0 0
        %944 = vmatpush1.bf16.xpose.msra.mxu0 0
        %945 = vmatprep.subr.bf16.mxu0 0
        %946 = vmatpush1.bf16.xpose.msra.mxu0 0
        %947 = vmatprep.subr.bf16.mxu0 0
        %948 = vmatpush1.bf16.xpose.msra.mxu0 0
        %949 = vmatprep.subr.bf16.mxu0 0
        %950 = vmatpush1.bf16.xpose.msra.mxu0 0
        %951 = vmatprep.subr.bf16.mxu0 0
        %952 = vmatpush1.bf16.xpose.msra.mxu0 0
        %953 = vmatprep.subr.bf16.mxu0 0
        %954 = vmatpush1.bf16.xpose.msra.mxu0 0
        %955 = vmatprep.subr.bf16.mxu0 0
        %956 = vmatpush1.bf16.xpose.msra.mxu0 0
        %957 = vmatprep.subr.bf16.mxu0 0
        %958 = vmatpush1.bf16.xpose.msra.mxu0 0
        %959 = vmatprep.subr.bf16.mxu0 0
        %960 = vmatpush1.bf16.xpose.msra.mxu0 0
        %961 = vmatprep.mubr.bf16.mxu0 0
        %962 = vmatmul.mubr.bf16.gmra.mrb[0].mxu0 %v924
        %v963 = vpop.f32.mrb[0].mxu0
        %v964 = vadd.f32 0.0, %v963
        %v965 = vpop.f32.mrb[0].mxu0
        %v966 = vpop.f32.mrb[0].mxu0
        %v967 = vpop.f32.mrb[0].mxu0
        %968 = vdwg.mxu0
        %v969 = vld [vmem:[#allocation3] sm:$0xff]
        %v970 = vsel %vm832, %v964, -inf
        %971 = vmax.xlane.f32.xlu0 %v970
        %v972 = vpop.xlane.xlu0 %971
        %v973 = vmax.f32 %v969, %v972
        %v974 = vsub.f32 %v969, %v973
        %v975 = vmul.f32 %v974, 1.442695
        %v976 = vpow.pop %v975
        %978 = vset.pattern.permute.xlu0 1
        %979 = vperm.xlu0 %978, %v973
        %v980 = vpop.permute.xlu0 %979
        %v982 = vsub.f32 %v964, %v980
        %v983 = vmul.f32 %v982, 1.442695
        %v984 = vpow.pop %v983
        %v985 = vld [vmem:[#allocation4] sm:$0xff]
        %v986 = vmul.f32 %v976, %v985
        %v987 = vsel %vm832, %v984, 0.0
        %988 = vadd.xlane.f32.xlu0 %v987
        %v989 = vpop.xlane.xlu0 %988
        %v990 = vadd.f32 %v986, %v989
        %vm991 = vcmask 15368
        %992 = vst.msk [vmem:[#allocation4] sm:$0xff] %vm991, %v990
        %993 = vst.msk [vmem:[#allocation3] sm:$0xff] %vm991, %v973
        %v994 = vld [vmem:[#allocation5] sm:$0xff]
        %996 = vset.pattern.permute.xlu0 1
        %997 = vperm.xlu0 %996, %v976
        %v998 = vpop.permute.xlu0 %997
        %v1000 = vmul.f32 %v998, %v994
        %v1001 = vpack.c.bf16 %v984, %v984
        %1003 = vrot.lane.b32.xlu0 %v782, 112
        %v1004 = vpop.permute.xlu0 %1003
        %v1006 = vsel %vm832, %v1001, 0
        %v1009 = vsel %vm868, %v1004, 0
        %1011 = vmatprep.subr.bf16.mxu0 0
        %1012 = vmatpush1.bf16.msra.mxu0 %v1009
        %1013 = vmatprep.subr.bf16.mxu0 0
        %1014 = vmatpush1.bf16.msra.mxu0 0
        %1015 = vmatprep.subr.bf16.mxu0 0
        %1016 = vmatpush1.bf16.msra.mxu0 0
        %1017 = vmatprep.subr.bf16.mxu0 0
        %1018 = vmatpush1.bf16.msra.mxu0 0
        %1019 = vmatprep.subr.bf16.mxu0 0
        %1020 = vmatpush1.bf16.msra.mxu0 0
        %1021 = vmatprep.subr.bf16.mxu0 0
        %1022 = vmatpush1.bf16.msra.mxu0 0
        %1023 = vmatprep.subr.bf16.mxu0 0
        %1024 = vmatpush1.bf16.msra.mxu0 0
        %1025 = vmatprep.subr.bf16.mxu0 0
        %1026 = vmatpush1.bf16.msra.mxu0 0
        %1027 = vmatprep.subr.bf16.mxu0 0
        %1028 = vmatpush1.bf16.msra.mxu0 0
        %1029 = vmatprep.subr.bf16.mxu0 0
        %1030 = vmatpush1.bf16.msra.mxu0 0
        %1031 = vmatprep.subr.bf16.mxu0 0
        %1032 = vmatpush1.bf16.msra.mxu0 0
        %1033 = vmatprep.subr.bf16.mxu0 0
        %1034 = vmatpush1.bf16.msra.mxu0 0
        %1035 = vmatprep.subr.bf16.mxu0 0
        %1036 = vmatpush1.bf16.msra.mxu0 0
        %1037 = vmatprep.subr.bf16.mxu0 0
        %1038 = vmatpush1.bf16.msra.mxu0 0
        %1039 = vmatprep.subr.bf16.mxu0 0
        %1040 = vmatpush1.bf16.msra.mxu0 0
        %1041 = vmatprep.subr.bf16.mxu0 0
        %1042 = vmatpush1.bf16.msra.mxu0 0
        %1043 = vmatprep.mubr.bf16.mxu0 0
        %1044 = vmatmul.mubr.bf16.gmra.mrb[0].mxu0 %v1006
        %v1045 = vpop.f32.mrb[0].mxu0
        %v1046 = vadd.f32 0.0, %v1045
        %v1047 = vpop.f32.mrb[0].mxu0
        %v1048 = vpop.f32.mrb[0].mxu0
        %v1049 = vpop.f32.mrb[0].mxu0
        %1050 = vdwg.mxu0
        %1052 = vrot.lane.b32.xlu0 %v1046, 16
        %v1053 = vpop.permute.xlu0 %1052
        %v1055 = vadd.f32 %v1000, %v1053
        %vm1056 = vcmask 261248
        %1057 = vst.msk [vmem:[#allocation5] sm:$0xff] %vm1056, %v1055
        %v1058 = vld [vmem:[#allocation2] sm:$0xf]
        %v1060 = vunpack.c.l.b16 %v1058
        %v1061 = vpack.c.b16 %v1060, %v1060
        %1062 = vrot.lane.b32.xlu0 %v1061, 96
        %v1063 = vpop.permute.xlu0 %1062
        %1064 = vrot.lane.b32.xlu0 %v668, 96
        %v1065 = vpop.permute.xlu0 %1064
        %v1067 = vsel %vm784, %v1063, 0
        %v1070 = vsel %vm784, %v1065, 0
        %1072 = vmatprep.subr.bf16.mxu0 0
        %1073 = vmatpush1.bf16.xpose.msra.mxu0 %v1070
        %1074 = vmatprep.subr.bf16.mxu0 0
        %1075 = vmatpush1.bf16.xpose.msra.mxu0 0
        %1076 = vmatprep.subr.bf16.mxu0 0
        %1077 = vmatpush1.bf16.xpose.msra.mxu0 0
        %1078 = vmatprep.subr.bf16.mxu0 0
        %1079 = vmatpush1.bf16.xpose.msra.mxu0 0
        %1080 = vmatprep.subr.bf16.mxu0 0
        %1081 = vmatpush1.bf16.xpose.msra.mxu0 0
        %1082 = vmatprep.subr.bf16.mxu0 0
        %1083 = vmatpush1.bf16.xpose.msra.mxu0 0
        %1084 = vmatprep.subr.bf16.mxu0 0
        %1085 = vmatpush1.bf16.xpose.msra.mxu0 0
        %1086 = vmatprep.subr.bf16.mxu0 0
        %1087 = vmatpush1.bf16.xpose.msra.mxu0 0
        %1088 = vmatprep.subr.bf16.mxu0 0
        %1089 = vmatpush1.bf16.xpose.msra.mxu0 0
        %1090 = vmatprep.subr.bf16.mxu0 0
        %1091 = vmatpush1.bf16.xpose.msra.mxu0 0
        %1092 = vmatprep.subr.bf16.mxu0 0
        %1093 = vmatpush1.bf16.xpose.msra.mxu0 0
        %1094 = vmatprep.subr.bf16.mxu0 0
        %1095 = vmatpush1.bf16.xpose.msra.mxu0 0
        %1096 = vmatprep.subr.bf16.mxu0 0
        %1097 = vmatpush1.bf16.xpose.msra.mxu0 0
        %1098 = vmatprep.subr.bf16.mxu0 0
        %1099 = vmatpush1.bf16.xpose.msra.mxu0 0
        %1100 = vmatprep.subr.bf16.mxu0 0
        %1101 = vmatpush1.bf16.xpose.msra.mxu0 0
        %1102 = vmatprep.subr.bf16.mxu0 0
        %1103 = vmatpush1.bf16.xpose.msra.mxu0 0
        %1104 = vmatprep.mubr.bf16.mxu0 0
        %1105 = vmatmul.mubr.bf16.gmra.mrb[0].mxu0 %v1067
        %v1106 = vpop.f32.mrb[0].mxu0
        %v1107 = vadd.f32 0.0, %v1106
        %v1108 = vpop.f32.mrb[0].mxu0
        %v1109 = vpop.f32.mrb[0].mxu0
        %v1110 = vpop.f32.mrb[0].mxu0
        %1111 = vdwg.mxu0
        %v1112 = vld [vmem:[#allocation3] sm:$0xff]
        %v1113 = vsel %vm832, %v1107, -inf
        %1114 = vmax.xlane.f32.xlu0 %v1113
        %v1115 = vpop.xlane.xlu0 %1114
        %v1116 = vmax.f32 %v1112, %v1115
        %v1117 = vsub.f32 %v1112, %v1116
        %v1118 = vmul.f32 %v1117, 1.442695
        %v1119 = vpow.pop %v1118
        %1121 = vset.pattern.permute.xlu0 2
        %1122 = vperm.xlu0 %1121, %v1116
        %v1123 = vpop.permute.xlu0 %1122
        %v1125 = vsub.f32 %v1107, %v1123
        %v1126 = vmul.f32 %v1125, 1.442695
        %v1127 = vpow.pop %v1126
        %v1128 = vld [vmem:[#allocation4] sm:$0xff]
        %v1129 = vmul.f32 %v1119, %v1128
        %v1130 = vsel %vm832, %v1127, 0.0
        %1131 = vadd.xlane.f32.xlu0 %v1130
        %v1132 = vpop.xlane.xlu0 %1131
        %v1133 = vadd.f32 %v1129, %v1132
        %vm1134 = vcmask 23568
        %1135 = vst.msk [vmem:[#allocation4] sm:$0xff] %vm1134, %v1133
        %1136 = vst.msk [vmem:[#allocation3] sm:$0xff] %vm1134, %v1116
        %v1137 = vld [vmem:[#allocation5] sm:$0xff]
        %1139 = vset.pattern.permute.xlu0 2
        %1140 = vperm.xlu0 %1139, %v1119
        %v1141 = vpop.permute.xlu0 %1140
        %v1143 = vmul.f32 %v1141, %v1137
        %v1144 = vpack.c.bf16 %v1127, %v1127
        %1145 = vrot.lane.b32.xlu0 %v782, 96
        %v1146 = vpop.permute.xlu0 %1145
        %v1148 = vsel %vm832, %v1144, 0
        %v1151 = vsel %vm868, %v1146, 0
        %1153 = vmatprep.subr.bf16.mxu0 0
        %1154 = vmatpush1.bf16.msra.mxu0 %v1151
        %1155 = vmatprep.subr.bf16.mxu0 0
        %1156 = vmatpush1.bf16.msra.mxu0 0
        %1157 = vmatprep.subr.bf16.mxu0 0
        %1158 = vmatpush1.bf16.msra.mxu0 0
        %1159 = vmatprep.subr.bf16.mxu0 0
        %1160 = vmatpush1.bf16.msra.mxu0 0
        %1161 = vmatprep.subr.bf16.mxu0 0
        %1162 = vmatpush1.bf16.msra.mxu0 0
        %1163 = vmatprep.subr.bf16.mxu0 0
        %1164 = vmatpush1.bf16.msra.mxu0 0
        %1165 = vmatprep.subr.bf16.mxu0 0
        %1166 = vmatpush1.bf16.msra.mxu0 0
        %1167 = vmatprep.subr.bf16.mxu0 0
        %1168 = vmatpush1.bf16.msra.mxu0 0
        %1169 = vmatprep.subr.bf16.mxu0 0
        %1170 = vmatpush1.bf16.msra.mxu0 0
        %1171 = vmatprep.subr.bf16.mxu0 0
        %1172 = vmatpush1.bf16.msra.mxu0 0
        %1173 = vmatprep.subr.bf16.mxu0 0
        %1174 = vmatpush1.bf16.msra.mxu0 0
        %1175 = vmatprep.subr.bf16.mxu0 0
        %1176 = vmatpush1.bf16.msra.mxu0 0
        %1177 = vmatprep.subr.bf16.mxu0 0
        %1178 = vmatpush1.bf16.msra.mxu0 0
        %1179 = vmatprep.subr.bf16.mxu0 0
        %1180 = vmatpush1.bf16.msra.mxu0 0
        %1181 = vmatprep.subr.bf16.mxu0 0
        %1182 = vmatpush1.bf16.msra.mxu0 0
        %1183 = vmatprep.subr.bf16.mxu0 0
        %1184 = vmatpush1.bf16.msra.mxu0 0
        %1185 = vmatprep.mubr.bf16.mxu0 0
        %1186 = vmatmul.mubr.bf16.gmra.mrb[0].mxu0 %v1148
        %v1187 = vpop.f32.mrb[0].mxu0
        %v1188 = vadd.f32 0.0, %v1187
        %v1189 = vpop.f32.mrb[0].mxu0
        %v1190 = vpop.f32.mrb[0].mxu0
        %v1191 = vpop.f32.mrb[0].mxu0
        %1192 = vdwg.mxu0
        %1194 = vrot.lane.b32.xlu0 %v1188, 32
        %v1195 = vpop.permute.xlu0 %1194
        %v1197 = vadd.f32 %v1143, %v1195
        %vm1198 = vcmask 392448
        %1199 = vst.msk [vmem:[#allocation5] sm:$0xff] %vm1198, %v1197
        %v1200 = vld [vmem:[#allocation2] sm:$0xf]
        %v1202 = vunpack.c.l.b16 %v1200
        %v1203 = vpack.c.b16 %v1202, %v1202
        %1204 = vrot.lane.b32.xlu0 %v1203, 80
        %v1205 = vpop.permute.xlu0 %1204
        %1206 = vrot.lane.b32.xlu0 %v668, 80
        %v1207 = vpop.permute.xlu0 %1206
        %v1209 = vsel %vm784, %v1205, 0
        %v1212 = vsel %vm784, %v1207, 0
        %1214 = vmatprep.subr.bf16.mxu0 0
        %1215 = vmatpush1.bf16.xpose.msra.mxu0 %v1212
        %1216 = vmatprep.subr.bf16.mxu0 0
        %1217 = vmatpush1.bf16.xpose.msra.mxu0 0
        %1218 = vmatprep.subr.bf16.mxu0 0
        %1219 = vmatpush1.bf16.xpose.msra.mxu0 0
        %1220 = vmatprep.subr.bf16.mxu0 0
        %1221 = vmatpush1.bf16.xpose.msra.mxu0 0
        %1222 = vmatprep.subr.bf16.mxu0 0
        %1223 = vmatpush1.bf16.xpose.msra.mxu0 0
        %1224 = vmatprep.subr.bf16.mxu0 0
        %1225 = vmatpush1.bf16.xpose.msra.mxu0 0
        %1226 = vmatprep.subr.bf16.mxu0 0
        %1227 = vmatpush1.bf16.xpose.msra.mxu0 0
        %1228 = vmatprep.subr.bf16.mxu0 0
        %1229 = vmatpush1.bf16.xpose.msra.mxu0 0
        %1230 = vmatprep.subr.bf16.mxu0 0
        %1231 = vmatpush1.bf16.xpose.msra.mxu0 0
        %1232 = vmatprep.subr.bf16.mxu0 0
        %1233 = vmatpush1.bf16.xpose.msra.mxu0 0
        %1234 = vmatprep.subr.bf16.mxu0 0
        %1235 = vmatpush1.bf16.xpose.msra.mxu0 0
        %1236 = vmatprep.subr.bf16.mxu0 0
        %1237 = vmatpush1.bf16.xpose.msra.mxu0 0
        %1238 = vmatprep.subr.bf16.mxu0 0
        %1239 = vmatpush1.bf16.xpose.msra.mxu0 0
        %1240 = vmatprep.subr.bf16.mxu0 0
        %1241 = vmatpush1.bf16.xpose.msra.mxu0 0
        %1242 = vmatprep.subr.bf16.mxu0 0
        %1243 = vmatpush1.bf16.xpose.msra.mxu0 0
        %1244 = vmatprep.subr.bf16.mxu0 0
        %1245 = vmatpush1.bf16.xpose.msra.mxu0 0
        %1246 = vmatprep.mubr.bf16.mxu0 0
        %1247 = vmatmul.mubr.bf16.gmra.mrb[0].mxu0 %v1209
        %v1248 = vpop.f32.mrb[0].mxu0
        %v1249 = vadd.f32 0.0, %v1248
        %v1250 = vpop.f32.mrb[0].mxu0
        %v1251 = vpop.f32.mrb[0].mxu0
        %v1252 = vpop.f32.mrb[0].mxu0
        %1253 = vdwg.mxu0
        %v1254 = vld [vmem:[#allocation3] sm:$0xff]
        %v1255 = vsel %vm832, %v1249, -inf
        %1256 = vmax.xlane.f32.xlu0 %v1255
        %v1257 = vpop.xlane.xlu0 %1256
        %v1258 = vmax.f32 %v1254, %v1257
        %v1259 = vsub.f32 %v1254, %v1258
        %v1260 = vmul.f32 %v1259, 1.442695
        %v1261 = vpow.pop %v1260
        %1263 = vset.pattern.permute.xlu0 3
        %1264 = vperm.xlu0 %1263, %v1258
        %v1265 = vpop.permute.xlu0 %1264
        %v1267 = vsub.f32 %v1249, %v1265
        %v1268 = vmul.f32 %v1267, 1.442695
        %v1269 = vpow.pop %v1268
        %v1270 = vld [vmem:[#allocation4] sm:$0xff]
        %v1271 = vmul.f32 %v1261, %v1270
        %v1272 = vsel %vm832, %v1269, 0.0
        %1273 = vadd.xlane.f32.xlu0 %v1272
        %v1274 = vpop.xlane.xlu0 %1273
        %v1275 = vadd.f32 %v1271, %v1274
        %vm1276 = vcmask 31768
        %1277 = vst.msk [vmem:[#allocation4] sm:$0xff] %vm1276, %v1275
        %1278 = vst.msk [vmem:[#allocation3] sm:$0xff] %vm1276, %v1258
        %v1279 = vld [vmem:[#allocation5] sm:$0xff]
        %1281 = vset.pattern.permute.xlu0 3
        %1282 = vperm.xlu0 %1281, %v1261
        %v1283 = vpop.permute.xlu0 %1282
        %v1285 = vmul.f32 %v1283, %v1279
        %v1286 = vpack.c.bf16 %v1269, %v1269
        %1287 = vrot.lane.b32.xlu0 %v782, 80
        %v1288 = vpop.permute.xlu0 %1287
        %v1290 = vsel %vm832, %v1286, 0
        %v1293 = vsel %vm868, %v1288, 0
        %1295 = vmatprep.subr.bf16.mxu0 0
        %1296 = vmatpush1.bf16.msra.mxu0 %v1293
        %1297 = vmatprep.subr.bf16.mxu0 0
        %1298 = vmatpush1.bf16.msra.mxu0 0
        %1299 = vmatprep.subr.bf16.mxu0 0
        %1300 = vmatpush1.bf16.msra.mxu0 0
        %1301 = vmatprep.subr.bf16.mxu0 0
        %1302 = vmatpush1.bf16.msra.mxu0 0
        %1303 = vmatprep.subr.bf16.mxu0 0
        %1304 = vmatpush1.bf16.msra.mxu0 0
        %1305 = vmatprep.subr.bf16.mxu0 0
        %1306 = vmatpush1.bf16.msra.mxu0 0
        %1307 = vmatprep.subr.bf16.mxu0 0
        %1308 = vmatpush1.bf16.msra.mxu0 0
        %1309 = vmatprep.subr.bf16.mxu0 0
        %1310 = vmatpush1.bf16.msra.mxu0 0
        %1311 = vmatprep.subr.bf16.mxu0 0
        %1312 = vmatpush1.bf16.msra.mxu0 0
        %1313 = vmatprep.subr.bf16.mxu0 0
        %1314 = vmatpush1.bf16.msra.mxu0 0
        %1315 = vmatprep.subr.bf16.mxu0 0
        %1316 = vmatpush1.bf16.msra.mxu0 0
        %1317 = vmatprep.subr.bf16.mxu0 0
        %1318 = vmatpush1.bf16.msra.mxu0 0
        %1319 = vmatprep.subr.bf16.mxu0 0
        %1320 = vmatpush1.bf16.msra.mxu0 0
        %1321 = vmatprep.subr.bf16.mxu0 0
        %1322 = vmatpush1.bf16.msra.mxu0 0
        %1323 = vmatprep.subr.bf16.mxu0 0
        %1324 = vmatpush1.bf16.msra.mxu0 0
        %1325 = vmatprep.subr.bf16.mxu0 0
        %1326 = vmatpush1.bf16.msra.mxu0 0
        %1327 = vmatprep.mubr.bf16.mxu0 0
        %1328 = vmatmul.mubr.bf16.gmra.mrb[0].mxu0 %v1290
        %v1329 = vpop.f32.mrb[0].mxu0
        %v1330 = vadd.f32 0.0, %v1329
        %v1331 = vpop.f32.mrb[0].mxu0
        %v1332 = vpop.f32.mrb[0].mxu0
        %v1333 = vpop.f32.mrb[0].mxu0
        %1334 = vdwg.mxu0
        %1336 = vrot.lane.b32.xlu0 %v1330, 48
        %v1337 = vpop.permute.xlu0 %1336
        %v1339 = vadd.f32 %v1285, %v1337
        %vm1340 = vcmask 523648
        %1341 = vst.msk [vmem:[#allocation5] sm:$0xff] %vm1340, %v1339
        %v1342 = vld [vmem:[#allocation2] sm:$0xf]
        %v1344 = vunpack.c.l.b16 %v1342
        %v1345 = vpack.c.b16 %v1344, %v1344
        %1346 = vrot.lane.b32.xlu0 %v1345, 64
        %v1347 = vpop.permute.xlu0 %1346
        %1348 = vrot.lane.b32.xlu0 %v668, 64
        %v1349 = vpop.permute.xlu0 %1348
        %v1351 = vsel %vm784, %v1347, 0
        %v1354 = vsel %vm784, %v1349, 0
        %1356 = vmatprep.subr.bf16.mxu0 0
        %1357 = vmatpush1.bf16.xpose.msra.mxu0 %v1354
        %1358 = vmatprep.subr.bf16.mxu0 0
        %1359 = vmatpush1.bf16.xpose.msra.mxu0 0
        %1360 = vmatprep.subr.bf16.mxu0 0
        %1361 = vmatpush1.bf16.xpose.msra.mxu0 0
        %1362 = vmatprep.subr.bf16.mxu0 0
        %1363 = vmatpush1.bf16.xpose.msra.mxu0 0
        %1364 = vmatprep.subr.bf16.mxu0 0
        %1365 = vmatpush1.bf16.xpose.msra.mxu0 0
        %1366 = vmatprep.subr.bf16.mxu0 0
        %1367 = vmatpush1.bf16.xpose.msra.mxu0 0
        %1368 = vmatprep.subr.bf16.mxu0 0
        %1369 = vmatpush1.bf16.xpose.msra.mxu0 0
        %1370 = vmatprep.subr.bf16.mxu0 0
        %1371 = vmatpush1.bf16.xpose.msra.mxu0 0
        %1372 = vmatprep.subr.bf16.mxu0 0
        %1373 = vmatpush1.bf16.xpose.msra.mxu0 0
        %1374 = vmatprep.subr.bf16.mxu0 0
        %1375 = vmatpush1.bf16.xpose.msra.mxu0 0
        %1376 = vmatprep.subr.bf16.mxu0 0
        %1377 = vmatpush1.bf16.xpose.msra.mxu0 0
        %1378 = vmatprep.subr.bf16.mxu0 0
        %1379 = vmatpush1.bf16.xpose.msra.mxu0 0
        %1380 = vmatprep.subr.bf16.mxu0 0
        %1381 = vmatpush1.bf16.xpose.msra.mxu0 0
        %1382 = vmatprep.subr.bf16.mxu0 0
        %1383 = vmatpush1.bf16.xpose.msra.mxu0 0
        %1384 = vmatprep.subr.bf16.mxu0 0
        %1385 = vmatpush1.bf16.xpose.msra.mxu0 0
        %1386 = vmatprep.subr.bf16.mxu0 0
        %1387 = vmatpush1.bf16.xpose.msra.mxu0 0
        %1388 = vmatprep.mubr.bf16.mxu0 0
        %1389 = vmatmul.mubr.bf16.gmra.mrb[0].mxu0 %v1351
        %v1390 = vpop.f32.mrb[0].mxu0
        %v1391 = vadd.f32 0.0, %v1390
        %v1392 = vpop.f32.mrb[0].mxu0
        %v1393 = vpop.f32.mrb[0].mxu0
        %v1394 = vpop.f32.mrb[0].mxu0
        %1395 = vdwg.mxu0
        %v1396 = vld [vmem:[#allocation3] sm:$0xff]
        %v1397 = vsel %vm832, %v1391, -inf
        %1398 = vmax.xlane.f32.xlu0 %v1397
        %v1399 = vpop.xlane.xlu0 %1398
        %v1400 = vmax.f32 %v1396, %v1399
        %v1401 = vsub.f32 %v1396, %v1400
        %v1402 = vmul.f32 %v1401, 1.442695
        %v1403 = vpow.pop %v1402
        %1405 = vset.pattern.permute.xlu0 4
        %1406 = vperm.xlu0 %1405, %v1400
        %v1407 = vpop.permute.xlu0 %1406
        %v1409 = vsub.f32 %v1391, %v1407
        %v1410 = vmul.f32 %v1409, 1.442695
        %v1411 = vpow.pop %v1410
        %v1412 = vld [vmem:[#allocation4] sm:$0xff]
        %v1413 = vmul.f32 %v1403, %v1412
        %v1414 = vsel %vm832, %v1411, 0.0
        %1415 = vadd.xlane.f32.xlu0 %v1414
        %v1416 = vpop.xlane.xlu0 %1415
        %v1417 = vadd.f32 %v1413, %v1416
        %vm1418 = vcmask 39968
        %1419 = vst.msk [vmem:[#allocation4] sm:$0xff] %vm1418, %v1417
        %1420 = vst.msk [vmem:[#allocation3] sm:$0xff] %vm1418, %v1400
        %v1421 = vld [vmem:[#allocation5] sm:$0xff]
        %1423 = vset.pattern.permute.xlu0 4
        %1424 = vperm.xlu0 %1423, %v1403
        %v1425 = vpop.permute.xlu0 %1424
        %v1427 = vmul.f32 %v1425, %v1421
        %v1428 = vpack.c.bf16 %v1411, %v1411
        %1429 = vrot.lane.b32.xlu0 %v782, 64
        %v1430 = vpop.permute.xlu0 %1429
        %v1432 = vsel %vm832, %v1428, 0
        %v1435 = vsel %vm868, %v1430, 0
        %1437 = vmatprep.subr.bf16.mxu0 0
        %1438 = vmatpush1.bf16.msra.mxu0 %v1435
        %1439 = vmatprep.subr.bf16.mxu0 0
        %1440 = vmatpush1.bf16.msra.mxu0 0
        %1441 = vmatprep.subr.bf16.mxu0 0
        %1442 = vmatpush1.bf16.msra.mxu0 0
        %1443 = vmatprep.subr.bf16.mxu0 0
        %1444 = vmatpush1.bf16.msra.mxu0 0
        %1445 = vmatprep.subr.bf16.mxu0 0
        %1446 = vmatpush1.bf16.msra.mxu0 0
        %1447 = vmatprep.subr.bf16.mxu0 0
        %1448 = vmatpush1.bf16.msra.mxu0 0
        %1449 = vmatprep.subr.bf16.mxu0 0
        %1450 = vmatpush1.bf16.msra.mxu0 0
        %1451 = vmatprep.subr.bf16.mxu0 0
        %1452 = vmatpush1.bf16.msra.mxu0 0
        %1453 = vmatprep.subr.bf16.mxu0 0
        %1454 = vmatpush1.bf16.msra.mxu0 0
        %1455 = vmatprep.subr.bf16.mxu0 0
        %1456 = vmatpush1.bf16.msra.mxu0 0
        %1457 = vmatprep.subr.bf16.mxu0 0
        %1458 = vmatpush1.bf16.msra.mxu0 0
        %1459 = vmatprep.subr.bf16.mxu0 0
        %1460 = vmatpush1.bf16.msra.mxu0 0
        %1461 = vmatprep.subr.bf16.mxu0 0
        %1462 = vmatpush1.bf16.msra.mxu0 0
        %1463 = vmatprep.subr.bf16.mxu0 0
        %1464 = vmatpush1.bf16.msra.mxu0 0
        %1465 = vmatprep.subr.bf16.mxu0 0
        %1466 = vmatpush1.bf16.msra.mxu0 0
        %1467 = vmatprep.subr.bf16.mxu0 0
        %1468 = vmatpush1.bf16.msra.mxu0 0
        %1469 = vmatprep.mubr.bf16.mxu0 0
        %1470 = vmatmul.mubr.bf16.gmra.mrb[0].mxu0 %v1432
        %v1471 = vpop.f32.mrb[0].mxu0
        %v1472 = vadd.f32 0.0, %v1471
        %v1473 = vpop.f32.mrb[0].mxu0
        %v1474 = vpop.f32.mrb[0].mxu0
        %v1475 = vpop.f32.mrb[0].mxu0
        %1476 = vdwg.mxu0
        %1478 = vrot.lane.b32.xlu0 %v1472, 64
        %v1479 = vpop.permute.xlu0 %1478
        %v1481 = vadd.f32 %v1427, %v1479
        %vm1482 = vcmask 654848
        %1483 = vst.msk [vmem:[#allocation5] sm:$0xff] %vm1482, %v1481
        %v1484 = vld [vmem:[#allocation2] sm:$0xf]
        %v1486 = vunpack.c.l.b16 %v1484
        %v1487 = vpack.c.b16 %v1486, %v1486
        %1488 = vrot.lane.b32.xlu0 %v1487, 48
        %v1489 = vpop.permute.xlu0 %1488
        %1490 = vrot.lane.b32.xlu0 %v668, 48
        %v1491 = vpop.permute.xlu0 %1490
        %v1493 = vsel %vm784, %v1489, 0
        %v1496 = vsel %vm784, %v1491, 0
        %1498 = vmatprep.subr.bf16.mxu0 0
        %1499 = vmatpush1.bf16.xpose.msra.mxu0 %v1496
        %1500 = vmatprep.subr.bf16.mxu0 0
        %1501 = vmatpush1.bf16.xpose.msra.mxu0 0
        %1502 = vmatprep.subr.bf16.mxu0 0
        %1503 = vmatpush1.bf16.xpose.msra.mxu0 0
        %1504 = vmatprep.subr.bf16.mxu0 0
        %1505 = vmatpush1.bf16.xpose.msra.mxu0 0
        %1506 = vmatprep.subr.bf16.mxu0 0
        %1507 = vmatpush1.bf16.xpose.msra.mxu0 0
        %1508 = vmatprep.subr.bf16.mxu0 0
        %1509 = vmatpush1.bf16.xpose.msra.mxu0 0
        %1510 = vmatprep.subr.bf16.mxu0 0
        %1511 = vmatpush1.bf16.xpose.msra.mxu0 0
        %1512 = vmatprep.subr.bf16.mxu0 0
        %1513 = vmatpush1.bf16.xpose.msra.mxu0 0
        %1514 = vmatprep.subr.bf16.mxu0 0
        %1515 = vmatpush1.bf16.xpose.msra.mxu0 0
        %1516 = vmatprep.subr.bf16.mxu0 0
        %1517 = vmatpush1.bf16.xpose.msra.mxu0 0
        %1518 = vmatprep.subr.bf16.mxu0 0
        %1519 = vmatpush1.bf16.xpose.msra.mxu0 0
        %1520 = vmatprep.subr.bf16.mxu0 0
        %1521 = vmatpush1.bf16.xpose.msra.mxu0 0
        %1522 = vmatprep.subr.bf16.mxu0 0
        %1523 = vmatpush1.bf16.xpose.msra.mxu0 0
        %1524 = vmatprep.subr.bf16.mxu0 0
        %1525 = vmatpush1.bf16.xpose.msra.mxu0 0
        %1526 = vmatprep.subr.bf16.mxu0 0
        %1527 = vmatpush1.bf16.xpose.msra.mxu0 0
        %1528 = vmatprep.subr.bf16.mxu0 0
        %1529 = vmatpush1.bf16.xpose.msra.mxu0 0
        %1530 = vmatprep.mubr.bf16.mxu0 0
        %1531 = vmatmul.mubr.bf16.gmra.mrb[0].mxu0 %v1493
        %v1532 = vpop.f32.mrb[0].mxu0
        %v1533 = vadd.f32 0.0, %v1532
        %v1534 = vpop.f32.mrb[0].mxu0
        %v1535 = vpop.f32.mrb[0].mxu0
        %v1536 = vpop.f32.mrb[0].mxu0
        %1537 = vdwg.mxu0
        %v1538 = vld [vmem:[#allocation3] sm:$0xff]
        %v1539 = vsel %vm832, %v1533, -inf
        %1540 = vmax.xlane.f32.xlu0 %v1539
        %v1541 = vpop.xlane.xlu0 %1540
        %v1542 = vmax.f32 %v1538, %v1541
        %v1543 = vsub.f32 %v1538, %v1542
        %v1544 = vmul.f32 %v1543, 1.442695
        %v1545 = vpow.pop %v1544
        %1547 = vset.pattern.permute.xlu0 5
        %1548 = vperm.xlu0 %1547, %v1542
        %v1549 = vpop.permute.xlu0 %1548
        %v1551 = vsub.f32 %v1533, %v1549
        %v1552 = vmul.f32 %v1551, 1.442695
        %v1553 = vpow.pop %v1552
        %v1554 = vld [vmem:[#allocation4] sm:$0xff]
        %v1555 = vmul.f32 %v1545, %v1554
        %v1556 = vsel %vm832, %v1553, 0.0
        %1557 = vadd.xlane.f32.xlu0 %v1556
        %v1558 = vpop.xlane.xlu0 %1557
        %v1559 = vadd.f32 %v1555, %v1558
        %vm1560 = vcmask 48168
        %1561 = vst.msk [vmem:[#allocation4] sm:$0xff] %vm1560, %v1559
        %1562 = vst.msk [vmem:[#allocation3] sm:$0xff] %vm1560, %v1542
        %v1563 = vld [vmem:[#allocation5] sm:$0xff]
        %1565 = vset.pattern.permute.xlu0 5
        %1566 = vperm.xlu0 %1565, %v1545
        %v1567 = vpop.permute.xlu0 %1566
        %v1569 = vmul.f32 %v1567, %v1563
        %v1570 = vpack.c.bf16 %v1553, %v1553
        %1571 = vrot.lane.b32.xlu0 %v782, 48
        %v1572 = vpop.permute.xlu0 %1571
        %v1574 = vsel %vm832, %v1570, 0
        %v1577 = vsel %vm868, %v1572, 0
        %1579 = vmatprep.subr.bf16.mxu0 0
        %1580 = vmatpush1.bf16.msra.mxu0 %v1577
        %1581 = vmatprep.subr.bf16.mxu0 0
        %1582 = vmatpush1.bf16.msra.mxu0 0
        %1583 = vmatprep.subr.bf16.mxu0 0
        %1584 = vmatpush1.bf16.msra.mxu0 0
        %1585 = vmatprep.subr.bf16.mxu0 0
        %1586 = vmatpush1.bf16.msra.mxu0 0
        %1587 = vmatprep.subr.bf16.mxu0 0
        %1588 = vmatpush1.bf16.msra.mxu0 0
        %1589 = vmatprep.subr.bf16.mxu0 0
        %1590 = vmatpush1.bf16.msra.mxu0 0
        %1591 = vmatprep.subr.bf16.mxu0 0
        %1592 = vmatpush1.bf16.msra.mxu0 0
        %1593 = vmatprep.subr.bf16.mxu0 0
        %1594 = vmatpush1.bf16.msra.mxu0 0
        %1595 = vmatprep.subr.bf16.mxu0 0
        %1596 = vmatpush1.bf16.msra.mxu0 0
        %1597 = vmatprep.subr.bf16.mxu0 0
        %1598 = vmatpush1.bf16.msra.mxu0 0
        %1599 = vmatprep.subr.bf16.mxu0 0
        %1600 = vmatpush1.bf16.msra.mxu0 0
        %1601 = vmatprep.subr.bf16.mxu0 0
        %1602 = vmatpush1.bf16.msra.mxu0 0
        %1603 = vmatprep.subr.bf16.mxu0 0
        %1604 = vmatpush1.bf16.msra.mxu0 0
        %1605 = vmatprep.subr.bf16.mxu0 0
        %1606 = vmatpush1.bf16.msra.mxu0 0
        %1607 = vmatprep.subr.bf16.mxu0 0
        %1608 = vmatpush1.bf16.msra.mxu0 0
        %1609 = vmatprep.subr.bf16.mxu0 0
        %1610 = vmatpush1.bf16.msra.mxu0 0
        %1611 = vmatprep.mubr.bf16.mxu0 0
        %1612 = vmatmul.mubr.bf16.gmra.mrb[0].mxu0 %v1574
        %v1613 = vpop.f32.mrb[0].mxu0
        %v1614 = vadd.f32 0.0, %v1613
        %v1615 = vpop.f32.mrb[0].mxu0
        %v1616 = vpop.f32.mrb[0].mxu0
        %v1617 = vpop.f32.mrb[0].mxu0
        %1618 = vdwg.mxu0
        %1620 = vrot.lane.b32.xlu0 %v1614, 80
        %v1621 = vpop.permute.xlu0 %1620
        %v1623 = vadd.f32 %v1569, %v1621
        %vm1624 = vcmask 786048
        %1625 = vst.msk [vmem:[#allocation5] sm:$0xff] %vm1624, %v1623
        %v1626 = vld [vmem:[#allocation2] sm:$0xf]
        %v1628 = vunpack.c.l.b16 %v1626
        %v1629 = vpack.c.b16 %v1628, %v1628
        %1630 = vrot.lane.b32.xlu0 %v1629, 32
        %v1631 = vpop.permute.xlu0 %1630
        %1632 = vrot.lane.b32.xlu0 %v668, 32
        %v1633 = vpop.permute.xlu0 %1632
        %v1635 = vsel %vm784, %v1631, 0
        %v1638 = vsel %vm784, %v1633, 0
        %1640 = vmatprep.subr.bf16.mxu0 0
        %1641 = vmatpush1.bf16.xpose.msra.mxu0 %v1638
        %1642 = vmatprep.subr.bf16.mxu0 0
        %1643 = vmatpush1.bf16.xpose.msra.mxu0 0
        %1644 = vmatprep.subr.bf16.mxu0 0
        %1645 = vmatpush1.bf16.xpose.msra.mxu0 0
        %1646 = vmatprep.subr.bf16.mxu0 0
        %1647 = vmatpush1.bf16.xpose.msra.mxu0 0
        %1648 = vmatprep.subr.bf16.mxu0 0
        %1649 = vmatpush1.bf16.xpose.msra.mxu0 0
        %1650 = vmatprep.subr.bf16.mxu0 0
        %1651 = vmatpush1.bf16.xpose.msra.mxu0 0
        %1652 = vmatprep.subr.bf16.mxu0 0
        %1653 = vmatpush1.bf16.xpose.msra.mxu0 0
        %1654 = vmatprep.subr.bf16.mxu0 0
        %1655 = vmatpush1.bf16.xpose.msra.mxu0 0
        %1656 = vmatprep.subr.bf16.mxu0 0
        %1657 = vmatpush1.bf16.xpose.msra.mxu0 0
        %1658 = vmatprep.subr.bf16.mxu0 0
        %1659 = vmatpush1.bf16.xpose.msra.mxu0 0
        %1660 = vmatprep.subr.bf16.mxu0 0
        %1661 = vmatpush1.bf16.xpose.msra.mxu0 0
        %1662 = vmatprep.subr.bf16.mxu0 0
        %1663 = vmatpush1.bf16.xpose.msra.mxu0 0
        %1664 = vmatprep.subr.bf16.mxu0 0
        %1665 = vmatpush1.bf16.xpose.msra.mxu0 0
        %1666 = vmatprep.subr.bf16.mxu0 0
        %1667 = vmatpush1.bf16.xpose.msra.mxu0 0
        %1668 = vmatprep.subr.bf16.mxu0 0
        %1669 = vmatpush1.bf16.xpose.msra.mxu0 0
        %1670 = vmatprep.subr.bf16.mxu0 0
        %1671 = vmatpush1.bf16.xpose.msra.mxu0 0
        %1672 = vmatprep.mubr.bf16.mxu0 0
        %1673 = vmatmul.mubr.bf16.gmra.mrb[0].mxu0 %v1635
        %v1674 = vpop.f32.mrb[0].mxu0
        %v1675 = vadd.f32 0.0, %v1674
        %v1676 = vpop.f32.mrb[0].mxu0
        %v1677 = vpop.f32.mrb[0].mxu0
        %v1678 = vpop.f32.mrb[0].mxu0
        %1679 = vdwg.mxu0
        %v1680 = vld [vmem:[#allocation3] sm:$0xff]
        %v1681 = vsel %vm832, %v1675, -inf
        %1682 = vmax.xlane.f32.xlu0 %v1681
        %v1683 = vpop.xlane.xlu0 %1682
        %v1684 = vmax.f32 %v1680, %v1683
        %v1685 = vsub.f32 %v1680, %v1684
        %v1686 = vmul.f32 %v1685, 1.442695
        %v1687 = vpow.pop %v1686
        %1689 = vset.pattern.permute.xlu0 6
        %1690 = vperm.xlu0 %1689, %v1684
        %v1691 = vpop.permute.xlu0 %1690
        %v1693 = vsub.f32 %v1675, %v1691
        %v1694 = vmul.f32 %v1693, 1.442695
        %v1695 = vpow.pop %v1694
        %v1696 = vld [vmem:[#allocation4] sm:$0xff]
        %v1697 = vmul.f32 %v1687, %v1696
        %v1698 = vsel %vm832, %v1695, 0.0
        %1699 = vadd.xlane.f32.xlu0 %v1698
        %v1700 = vpop.xlane.xlu0 %1699
        %v1701 = vadd.f32 %v1697, %v1700
        %vm1702 = vcmask 56368
        %1703 = vst.msk [vmem:[#allocation4] sm:$0xff] %vm1702, %v1701
        %1704 = vst.msk [vmem:[#allocation3] sm:$0xff] %vm1702, %v1684
        %v1705 = vld [vmem:[#allocation5] sm:$0xff]
        %1707 = vset.pattern.permute.xlu0 6
        %1708 = vperm.xlu0 %1707, %v1687
        %v1709 = vpop.permute.xlu0 %1708
        %v1711 = vmul.f32 %v1709, %v1705
        %v1712 = vpack.c.bf16 %v1695, %v1695
        %1713 = vrot.lane.b32.xlu0 %v782, 32
        %v1714 = vpop.permute.xlu0 %1713
        %v1716 = vsel %vm832, %v1712, 0
        %v1719 = vsel %vm868, %v1714, 0
        %1721 = vmatprep.subr.bf16.mxu0 0
        %1722 = vmatpush1.bf16.msra.mxu0 %v1719
        %1723 = vmatprep.subr.bf16.mxu0 0
        %1724 = vmatpush1.bf16.msra.mxu0 0
        %1725 = vmatprep.subr.bf16.mxu0 0
        %1726 = vmatpush1.bf16.msra.mxu0 0
        %1727 = vmatprep.subr.bf16.mxu0 0
        %1728 = vmatpush1.bf16.msra.mxu0 0
        %1729 = vmatprep.subr.bf16.mxu0 0
        %1730 = vmatpush1.bf16.msra.mxu0 0
        %1731 = vmatprep.subr.bf16.mxu0 0
        %1732 = vmatpush1.bf16.msra.mxu0 0
        %1733 = vmatprep.subr.bf16.mxu0 0
        %1734 = vmatpush1.bf16.msra.mxu0 0
        %1735 = vmatprep.subr.bf16.mxu0 0
        %1736 = vmatpush1.bf16.msra.mxu0 0
        %1737 = vmatprep.subr.bf16.mxu0 0
        %1738 = vmatpush1.bf16.msra.mxu0 0
        %1739 = vmatprep.subr.bf16.mxu0 0
        %1740 = vmatpush1.bf16.msra.mxu0 0
        %1741 = vmatprep.subr.bf16.mxu0 0
        %1742 = vmatpush1.bf16.msra.mxu0 0
        %1743 = vmatprep.subr.bf16.mxu0 0
        %1744 = vmatpush1.bf16.msra.mxu0 0
        %1745 = vmatprep.subr.bf16.mxu0 0
        %1746 = vmatpush1.bf16.msra.mxu0 0
        %1747 = vmatprep.subr.bf16.mxu0 0
        %1748 = vmatpush1.bf16.msra.mxu0 0
        %1749 = vmatprep.subr.bf16.mxu0 0
        %1750 = vmatpush1.bf16.msra.mxu0 0
        %1751 = vmatprep.subr.bf16.mxu0 0
        %1752 = vmatpush1.bf16.msra.mxu0 0
        %1753 = vmatprep.mubr.bf16.mxu0 0
        %1754 = vmatmul.mubr.bf16.gmra.mrb[0].mxu0 %v1716
        %v1755 = vpop.f32.mrb[0].mxu0
        %v1756 = vadd.f32 0.0, %v1755
        %v1757 = vpop.f32.mrb[0].mxu0
        %v1758 = vpop.f32.mrb[0].mxu0
        %v1759 = vpop.f32.mrb[0].mxu0
        %1760 = vdwg.mxu0
        %1762 = vrot.lane.b32.xlu0 %v1756, 96
        %v1763 = vpop.permute.xlu0 %1762
        %v1765 = vadd.f32 %v1711, %v1763
        %vm1766 = vcmask 917248
        %1767 = vst.msk [vmem:[#allocation5] sm:$0xff] %vm1766, %v1765
        %v1768 = vld [vmem:[#allocation2] sm:$0xf]
        %v1770 = vunpack.c.l.b16 %v1768
        %v1771 = vpack.c.b16 %v1770, %v1770
        %1772 = vrot.lane.b32.xlu0 %v1771, 16
        %v1773 = vpop.permute.xlu0 %1772
        %1774 = vrot.lane.b32.xlu0 %v668, 16
        %v1775 = vpop.permute.xlu0 %1774
        %v1777 = vsel %vm784, %v1773, 0
        %v1780 = vsel %vm784, %v1775, 0
        %1782 = vmatprep.subr.bf16.mxu0 0
        %1783 = vmatpush1.bf16.xpose.msra.mxu0 %v1780
        %1784 = vmatprep.subr.bf16.mxu0 0
        %1785 = vmatpush1.bf16.xpose.msra.mxu0 0
        %1786 = vmatprep.subr.bf16.mxu0 0
        %1787 = vmatpush1.bf16.xpose.msra.mxu0 0
        %1788 = vmatprep.subr.bf16.mxu0 0
        %1789 = vmatpush1.bf16.xpose.msra.mxu0 0
        %1790 = vmatprep.subr.bf16.mxu0 0
        %1791 = vmatpush1.bf16.xpose.msra.mxu0 0
        %1792 = vmatprep.subr.bf16.mxu0 0
        %1793 = vmatpush1.bf16.xpose.msra.mxu0 0
        %1794 = vmatprep.subr.bf16.mxu0 0
        %1795 = vmatpush1.bf16.xpose.msra.mxu0 0
        %1796 = vmatprep.subr.bf16.mxu0 0
        %1797 = vmatpush1.bf16.xpose.msra.mxu0 0
        %1798 = vmatprep.subr.bf16.mxu0 0
        %1799 = vmatpush1.bf16.xpose.msra.mxu0 0
        %1800 = vmatprep.subr.bf16.mxu0 0
        %1801 = vmatpush1.bf16.xpose.msra.mxu0 0
        %1802 = vmatprep.subr.bf16.mxu0 0
        %1803 = vmatpush1.bf16.xpose.msra.mxu0 0
        %1804 = vmatprep.subr.bf16.mxu0 0
        %1805 = vmatpush1.bf16.xpose.msra.mxu0 0
        %1806 = vmatprep.subr.bf16.mxu0 0
        %1807 = vmatpush1.bf16.xpose.msra.mxu0 0
        %1808 = vmatprep.subr.bf16.mxu0 0
        %1809 = vmatpush1.bf16.xpose.msra.mxu0 0
        %1810 = vmatprep.subr.bf16.mxu0 0
        %1811 = vmatpush1.bf16.xpose.msra.mxu0 0
        %1812 = vmatprep.subr.bf16.mxu0 0
        %1813 = vmatpush1.bf16.xpose.msra.mxu0 0
        %1814 = vmatprep.mubr.bf16.mxu0 0
        %1815 = vmatmul.mubr.bf16.gmra.mrb[0].mxu0 %v1777
        %v1816 = vpop.f32.mrb[0].mxu0
        %v1817 = vadd.f32 0.0, %v1816
        %v1818 = vpop.f32.mrb[0].mxu0
        %v1819 = vpop.f32.mrb[0].mxu0
        %v1820 = vpop.f32.mrb[0].mxu0
        %1821 = vdwg.mxu0
        %v1822 = vld [vmem:[#allocation3] sm:$0xff]
        %v1823 = vsel %vm832, %v1817, -inf
        %1824 = vmax.xlane.f32.xlu0 %v1823
        %v1825 = vpop.xlane.xlu0 %1824
        %v1826 = vmax.f32 %v1822, %v1825
        %v1827 = vsub.f32 %v1822, %v1826
        %v1828 = vmul.f32 %v1827, 1.442695
        %v1829 = vpow.pop %v1828
        %1831 = vset.pattern.permute.xlu0 7
        %1832 = vperm.xlu0 %1831, %v1826
        %v1833 = vpop.permute.xlu0 %1832
        %v1835 = vsub.f32 %v1817, %v1833
        %v1836 = vmul.f32 %v1835, 1.442695
        %v1837 = vpow.pop %v1836
        %v1838 = vld [vmem:[#allocation4] sm:$0xff]
        %v1839 = vmul.f32 %v1829, %v1838
        %v1840 = vsel %vm832, %v1837, 0.0
        %1841 = vadd.xlane.f32.xlu0 %v1840
        %v1842 = vpop.xlane.xlu0 %1841
        %v1843 = vadd.f32 %v1839, %v1842
        %vm1844 = vcmask 64568
        %1845 = vst.msk [vmem:[#allocation4] sm:$0xff] %vm1844, %v1843
        %1846 = vst.msk [vmem:[#allocation3] sm:$0xff] %vm1844, %v1826
        %v1847 = vld [vmem:[#allocation5] sm:$0xff]
        %1849 = vset.pattern.permute.xlu0 7
        %1850 = vperm.xlu0 %1849, %v1829
        %v1851 = vpop.permute.xlu0 %1850
        %v1853 = vmul.f32 %v1851, %v1847
        %v1854 = vpack.c.bf16 %v1837, %v1837
        %1855 = vrot.lane.b32.xlu0 %v782, 16
        %v1856 = vpop.permute.xlu0 %1855
        %v1858 = vsel %vm832, %v1854, 0
        %v1861 = vsel %vm868, %v1856, 0
        %1863 = vmatprep.subr.bf16.mxu0 0
        %1864 = vmatpush1.bf16.msra.mxu0 %v1861
        %1865 = vmatprep.subr.bf16.mxu0 0
        %1866 = vmatpush1.bf16.msra.mxu0 0
        %1867 = vmatprep.subr.bf16.mxu0 0
        %1868 = vmatpush1.bf16.msra.mxu0 0
        %1869 = vmatprep.subr.bf16.mxu0 0
        %1870 = vmatpush1.bf16.msra.mxu0 0
        %1871 = vmatprep.subr.bf16.mxu0 0
        %1872 = vmatpush1.bf16.msra.mxu0 0
        %1873 = vmatprep.subr.bf16.mxu0 0
        %1874 = vmatpush1.bf16.msra.mxu0 0
        %1875 = vmatprep.subr.bf16.mxu0 0
        %1876 = vmatpush1.bf16.msra.mxu0 0
        %1877 = vmatprep.subr.bf16.mxu0 0
        %1878 = vmatpush1.bf16.msra.mxu0 0
        %1879 = vmatprep.subr.bf16.mxu0 0
        %1880 = vmatpush1.bf16.msra.mxu0 0
        %1881 = vmatprep.subr.bf16.mxu0 0
        %1882 = vmatpush1.bf16.msra.mxu0 0
        %1883 = vmatprep.subr.bf16.mxu0 0
        %1884 = vmatpush1.bf16.msra.mxu0 0
        %1885 = vmatprep.subr.bf16.mxu0 0
        %1886 = vmatpush1.bf16.msra.mxu0 0
        %1887 = vmatprep.subr.bf16.mxu0 0
        %1888 = vmatpush1.bf16.msra.mxu0 0
        %1889 = vmatprep.subr.bf16.mxu0 0
        %1890 = vmatpush1.bf16.msra.mxu0 0
        %1891 = vmatprep.subr.bf16.mxu0 0
        %1892 = vmatpush1.bf16.msra.mxu0 0
        %1893 = vmatprep.subr.bf16.mxu0 0
        %1894 = vmatpush1.bf16.msra.mxu0 0
        %1895 = vmatprep.mubr.bf16.mxu0 0
        %1896 = vmatmul.mubr.bf16.gmra.mrb[0].mxu0 %v1858
        %v1897 = vpop.f32.mrb[0].mxu0
        %v1898 = vadd.f32 0.0, %v1897
        %v1899 = vpop.f32.mrb[0].mxu0
        %v1900 = vpop.f32.mrb[0].mxu0
        %v1901 = vpop.f32.mrb[0].mxu0
        %1902 = vdwg.mxu0
        %1904 = vrot.lane.b32.xlu0 %v1898, 112
        %v1905 = vpop.permute.xlu0 %1904
        %v1907 = vadd.f32 %v1853, %v1905
        %vm1908 = vcmask 1048448
        %1909 = vst.msk [vmem:[#allocation5] sm:$0xff] %vm1908, %v1907
        %p1910 = scmp.eq.s32.totalorder %s35, 1
        // Predicated region
        $region73: #{tpu_custom_call.1} parent=47 // pred_check
          %p1911 = pneg %p1910
        $region74: #{tpu_custom_call.1} parent=47 // pred_check_branch
          %1913 = sbr.rel (%p1911) target = $region76
        $region75: #{tpu_custom_call.1} parent=47 // pred_region
          %v1914 = vld [vmem:[#allocation4] sm:$0xff]
          %v1915 = vrcp.pop %v1914
          %v1916 = vld [vmem:[#allocation5] sm:$0xff]
          %1918 = vset.pattern.permute.xlu0 0
          %1919 = vperm.xlu0 %1918, %v1915
          %v1920 = vpop.permute.xlu0 %1919
          %v1922 = vmul.f32 %v1916, %v1920
          %1923 = vst.msk [vmem:[#allocation5] sm:$0xff] %vm784, %v1922
          %v1924 = vld [vmem:[#allocation5] sm:$0xff]
          %1925 = vset.pattern.permute.xlu0 1
          %1926 = vperm.xlu0 %1925, %v1915
          %v1927 = vpop.permute.xlu0 %1926
          %v1929 = vmul.f32 %v1924, %v1927
          %1930 = vst.msk [vmem:[#allocation5] sm:$0xff] %vm1056, %v1929
          %v1931 = vld [vmem:[#allocation5] sm:$0xff]
          %1932 = vset.pattern.permute.xlu0 2
          %1933 = vperm.xlu0 %1932, %v1915
          %v1934 = vpop.permute.xlu0 %1933
          %v1936 = vmul.f32 %v1931, %v1934
          %1937 = vst.msk [vmem:[#allocation5] sm:$0xff] %vm1198, %v1936
          %v1938 = vld [vmem:[#allocation5] sm:$0xff]
          %1939 = vset.pattern.permute.xlu0 3
          %1940 = vperm.xlu0 %1939, %v1915
          %v1941 = vpop.permute.xlu0 %1940
          %v1943 = vmul.f32 %v1938, %v1941
          %1944 = vst.msk [vmem:[#allocation5] sm:$0xff] %vm1340, %v1943
          %v1945 = vld [vmem:[#allocation5] sm:$0xff]
          %1946 = vset.pattern.permute.xlu0 4
          %1947 = vperm.xlu0 %1946, %v1915
          %v1948 = vpop.permute.xlu0 %1947
          %v1950 = vmul.f32 %v1945, %v1948
          %1951 = vst.msk [vmem:[#allocation5] sm:$0xff] %vm1482, %v1950
          %v1952 = vld [vmem:[#allocation5] sm:$0xff]
          %1953 = vset.pattern.permute.xlu0 5
          %1954 = vperm.xlu0 %1953, %v1915
          %v1955 = vpop.permute.xlu0 %1954
          %v1957 = vmul.f32 %v1952, %v1955
          %1958 = vst.msk [vmem:[#allocation5] sm:$0xff] %vm1624, %v1957
          %v1959 = vld [vmem:[#allocation5] sm:$0xff]
          %1960 = vset.pattern.permute.xlu0 6
          %1961 = vperm.xlu0 %1960, %v1915
          %v1962 = vpop.permute.xlu0 %1961
          %v1964 = vmul.f32 %v1959, %v1962
          %1965 = vst.msk [vmem:[#allocation5] sm:$0xff] %vm1766, %v1964
          %v1966 = vld [vmem:[#allocation5] sm:$0xff]
          %1967 = vset.pattern.permute.xlu0 7
          %1968 = vperm.xlu0 %1967, %v1915
          %v1969 = vpop.permute.xlu0 %1968
          %v1971 = vmul.f32 %v1966, %v1969
          %1972 = vst.msk [vmem:[#allocation5] sm:$0xff] %vm1908, %v1971
          %v1973 = vld [vmem:[#allocation5] sm:$0xff]
          %v1974 = vpack.c.bf16 %v1973, %v1973
          %v1975 = vld [vmem:[#allocation14] sm:$0xf]
          %v1976 = vld [vmem:[#allocation14 + $0x4] sm:$0xf]
          %v1977 = vld [vmem:[#allocation14 + $0x8] sm:$0xf]
          %v1978 = vld [vmem:[#allocation14 + $0xc] sm:$0xf]
          %v1979 = vld [vmem:[#allocation14 + $0x10] sm:$0xf]
          %v1980 = vld [vmem:[#allocation14 + $0x14] sm:$0xf]
          %v1981 = vld [vmem:[#allocation14 + $0x18] sm:$0xf]
          %v1982 = vld [vmem:[#allocation14 + $0x1c] sm:$0xf]
          %v1983 = vld [vmem:[#allocation14 + $0x20] sm:$0xf]
          %v1984 = vld [vmem:[#allocation14 + $0x24] sm:$0xf]
          %v1985 = vld [vmem:[#allocation14 + $0x28] sm:$0xf]
          %v1986 = vld [vmem:[#allocation14 + $0x2c] sm:$0xf]
          %v1987 = vld [vmem:[#allocation14 + $0x30] sm:$0xf]
          %v1988 = vld [vmem:[#allocation14 + $0x34] sm:$0xf]
          %v1989 = vld [vmem:[#allocation14 + $0x38] sm:$0xf]
          %v1990 = vld [vmem:[#allocation14 + $0x3c] sm:$0xf]
          %v1991 = vld [vmem:[%s6] sm:$0x1]
          %v1993 = vlaneseq
          %v1994 = vshrl.u32 %v1993, 7
          %v1995 = vsub.s32 0, %v1994
          %v1996 = vrot.slane %v1991, %v1995
          %v2014 = vunpack.c.l.b16 %v1975
          %v2015 = vunpack.c.l.b16 %v1976
          %v2016 = vunpack.c.l.b16 %v1977
          %v2017 = vunpack.c.l.b16 %v1978
          %v2018 = vunpack.c.l.b16 %v1979
          %v2019 = vunpack.c.l.b16 %v1980
          %v2020 = vunpack.c.l.b16 %v1981
          %v2021 = vunpack.c.l.b16 %v1982
          %v2022 = vunpack.c.l.b16 %v1983
          %v2023 = vunpack.c.l.b16 %v1984
          %v2024 = vunpack.c.l.b16 %v1985
          %v2025 = vunpack.c.l.b16 %v1986
          %v2026 = vunpack.c.l.b16 %v1987
          %v2027 = vunpack.c.l.b16 %v1988
          %v2028 = vunpack.c.l.b16 %v1989
          %v2029 = vunpack.c.l.b16 %v1990
          %v2030 = vpack.c.b16 %v2015, %v2014
          %v2031 = vpack.c.b16 %v2017, %v2016
          %v2032 = vpack.c.b16 %v2019, %v2018
          %v2033 = vpack.c.b16 %v2021, %v2020
          %v2034 = vpack.c.b16 %v2023, %v2022
          %v2035 = vpack.c.b16 %v2025, %v2024
          %v2036 = vpack.c.b16 %v2027, %v2026
          %v2037 = vpack.c.b16 %v2029, %v2028
          %2046 = vmatprep.subr.bf16.mxu0 0
          %2047 = vmatpush1.bf16.msra.mxu0 %v2030
          %2048 = vmatprep.subr.bf16.mxu0 0
          %2049 = vmatpush1.bf16.msra.mxu0 %v2031
          %2050 = vmatprep.subr.bf16.mxu0 0
          %2051 = vmatpush1.bf16.msra.mxu0 %v2032
          %2052 = vmatprep.subr.bf16.mxu0 0
          %2053 = vmatpush1.bf16.msra.mxu0 %v2033
          %2054 = vmatprep.subr.bf16.mxu0 0
          %2055 = vmatpush1.bf16.msra.mxu0 %v2034
          %2056 = vmatprep.subr.bf16.mxu0 0
          %2057 = vmatpush1.bf16.msra.mxu0 %v2035
          %2058 = vmatprep.subr.bf16.mxu0 0
          %2059 = vmatpush1.bf16.msra.mxu0 %v2036
          %2060 = vmatprep.subr.bf16.mxu0 0
          %2061 = vmatpush1.bf16.msra.mxu0 %v2037
          %2062 = vmatprep.subr.bf16.mxu0 0
          %2063 = vmatpush1.bf16.msra.mxu0 0
          %2064 = vmatprep.subr.bf16.mxu0 0
          %2065 = vmatpush1.bf16.msra.mxu0 0
          %2066 = vmatprep.subr.bf16.mxu0 0
          %2067 = vmatpush1.bf16.msra.mxu0 0
          %2068 = vmatprep.subr.bf16.mxu0 0
          %2069 = vmatpush1.bf16.msra.mxu0 0
          %2070 = vmatprep.subr.bf16.mxu0 0
          %2071 = vmatpush1.bf16.msra.mxu0 0
          %2072 = vmatprep.subr.bf16.mxu0 0
          %2073 = vmatpush1.bf16.msra.mxu0 0
          %2074 = vmatprep.subr.bf16.mxu0 0
          %2075 = vmatpush1.bf16.msra.mxu0 0
          %2076 = vmatprep.subr.bf16.mxu0 0
          %2077 = vmatpush1.bf16.msra.mxu0 0
          %2078 = vmatprep.mubr.bf16.mxu0 0
          %2079 = vmatmul.mubr.bf16.gmra.mrb[0].mxu0 %v1974
          %v2080 = vpop.f32.mrb[0].mxu0
          %v2081 = vadd.f32 %v1996, %v2080
          %v2082 = vpop.f32.mrb[0].mxu0
          %v2083 = vpop.f32.mrb[0].mxu0
          %v2084 = vpop.f32.mrb[0].mxu0
          %2085 = vdwg.mxu0
          %2086 = vst [vmem:[%s426] sm:$0xff] %v2081
        $region76: #{tpu_custom_call.1} parent=47 // pred_fallthru
          _
        %s2087 = sand.u32 %s225, 1
        %s2088 = scalar_lea.sflag [#allocation8], %s2087
        %s2089 = sand.u32 %s225, 1
        %s2090 = smul.addr %s2089, 8
        %s2091 = scalar_lea.vmem [#allocation15], %s2090
        // Predicated region
        $region77: #{tpu_custom_call.1} parent=47 // pred_check
          %p2092 = pneg %p235
        $region78: #{tpu_custom_call.1} parent=47 // pred_check_branch
          %2094 = sbr.rel (%p2092) target = $region80
        $region79: #{tpu_custom_call.1} parent=47 // pred_region
          %s2096 = ssub.s32 128, 128
          %2097 = vsyncadd %s2088, %s2096
          %s2098 = smul.addr %s33, 2
          %s2099 = sadd.s32 %s34, %s2098
          %s2100 = smul.addr %s2099, 128
          %s2101 = scalar_lea.hbm %s7, %s2100
          %s2103 = sshll.u32 %s2091, 4
          %s2104 = int_to_ptr.vmem [resolvable:$true] %s2103
          %2106 = dma.vmem_to_hbm [thread:$0]  %s2104, 128, %s2101, %s2088
        $region80: #{tpu_custom_call.1} parent=47 // pred_fallthru
          _
      $region48: #{tpu_custom_call.1} parent=5 // pred_fallthru
        _
      %p2107 = scmp.le.s32.totalorder 2, %s23
      // Predicated region
      $region81: #{tpu_custom_call.1} parent=5 // pred_check
        %p2108 = pneg %p2107
      $region82: #{tpu_custom_call.1} parent=5 // pred_check_branch
        %2110 = sbr.rel (%p2108) target = $region84
      $region83: #{tpu_custom_call.1} parent=5 // pred_region
        %s2111 = ssub.s32 %s23, 2
        // Predicated region
        $region85: #{tpu_custom_call.1} parent=83 // pred_check
          %p2112 = pneg %p241
        $region86: #{tpu_custom_call.1} parent=83 // pred_check_branch
          %2114 = sbr.rel (%p2112) target = $region88
        $region87: #{tpu_custom_call.1} parent=83 // pred_region
          %s2115 = sand.u32 %s226, 1
          %s2116 = scalar_lea.sflag [#allocation8], %s2115
          %s2117 = sand.u32 %s226, 1
          %s2118 = smul.addr %s2117, 8
          %s2119 = scalar_lea.vmem [#allocation15], %s2118
          %2120 = dma.done %s2116, 128
        $region88: #{tpu_custom_call.1} parent=83 // pred_fallthru
          _
      $region84: #{tpu_custom_call.1} parent=5 // pred_fallthru
        _
    $region6: #{tpu_custom_call.1} parent=1 // loop_footer
      %s27 = sadd.s32 1, %s23
    $region7: #{tpu_custom_call.1} parent=1 // loop_footer_branch
      %22 = sbr.rel target = $region3
    $region8: #{tpu_custom_call.1} parent=1 // loop_exit
      _
    %2121 = vsyncpa [#allocation7], 1
    %s2122 = scalar_lea.sflag [#allocation7], 1
    %2123 = vsyncpa %s2122, 1
    %2124 = vsyncpa [#allocation10], 1
    %s2125 = scalar_lea.sflag [#allocation10], 1
    %2126 = vsyncpa %s2125, 1
    %2127 = vsyncpa [#allocation13], 1
    %2128 = vsyncpa [#allocation8], 1
    %s2129 = scalar_lea.sflag [#allocation8], 1
    %2130 = vsyncpa %s2129, 1

</llo_original>
